<compile_context>
chip_gen: v7x
topology: tpu7x:2x2x1
jax: 0.10.0
libtpu: 0.0.40
codegen_flags: <defaults>
</compile_context>

<pallas_src>
import functools

import jax
import jax.numpy as jnp
import numpy as np
from jax.experimental import pallas as pl
from jax.experimental.pallas import tpu as pltpu


# ----------------------------- activations -----------------------------------
_REALFUNS = {
    "real": lambda x: x,
    "real+relu": lambda x: jnp.maximum(x, 0.0),
    "real+tanh": jnp.tanh,
}


def _round_up(x, m):
    return ((x + m - 1) // m) * m


# ----------------------------- parameter glue ---------------------------------
def _geometric_powers(Lambda, L):
    """powers[p, s] = Lambda[p]**s via cumulative product (more stable than pow)."""
    P = Lambda.shape[0]
    ones = jnp.ones((P, 1), dtype=Lambda.dtype)
    if L == 1:
        return ones
    rep = jnp.broadcast_to(Lambda[:, None], (P, L - 1))
    return jnp.concatenate([ones, jnp.cumprod(rep, axis=1)], axis=1)


def _build_basis_and_coeffs(Lambda, W, D, L):
    """Rank-(2P) shared basis + per-channel coefficients.

    Returns:
      G: (2P, L, L) float32 -- causal geometric Toeplitz basis, shared by all channels
           G[p][t, n]   = Re(Lambda[p]^(n-t)) for n >= t else 0
           G[P+p][t, n] = Im(Lambda[p]^(n-t)) for n >= t else 0
      C: (H, 2P+1) float32 -- [Re(W), -Im(W), D]; last column is the skip term.
    so that  y[h, :] = sum_q C[h, q] * (u[h, :] @ G[q]) + C[h, 2P] * u[h, :].
    """
    powers = _geometric_powers(Lambda, L)               # (P, L) complex
    idx = jnp.arange(L)
    diff = idx[None, :] - idx[:, None]                  # diff[t, n] = n - t
    causal = diff >= 0
    gather = jnp.clip(diff, 0, L - 1)
    g_re = jnp.where(causal[None], jnp.real(powers)[:, gather], 0.0)   # (P, L, L)
    g_im = jnp.where(causal[None], jnp.imag(powers)[:, gather], 0.0)   # (P, L, L)
    G = jnp.concatenate([g_re, g_im], axis=0).astype(jnp.float32)      # (2P, L, L)
    C = jnp.concatenate(
        [jnp.real(W), -jnp.imag(W), D[:, None]], axis=1).astype(jnp.float32)  # (H, 2P+1)
    return G, C


# ----------------------------- Pallas kernel ----------------------------------
def _rssm_rows_kernel(u_ref, g_ref, c_ref, *out_refs, nb, fwd_fns):
    """One grid step = one block of (batch*channel) rows.

    u_ref   : (Rb, L)       input rows (one row = one channel of one batch element)
    g_ref   : (2P, L, L)    shared causal Toeplitz basis (VMEM-resident across the grid)
    c_ref   : (Rb, 2P+1)    per-row coefficients; last column is the D skip
    out_refs: 1 or 2 refs of shape (Rb, L)
    """
    u = u_ref[...].astype(jnp.float32)        # (Rb, L)
    c = c_ref[...]                            # (Rb, 2P+1)

    # skip / feed-through term: D[h] * u[h, :]
    acc = c[:, nb:nb + 1] * u                 # (Rb, L)

    # rank-2P geometric Toeplitz basis, shared across all rows (MXU matmuls)
    for q in range(nb):
        xq = jnp.dot(u, g_ref[q], preferred_element_type=jnp.float32)   # (Rb, L)
        acc = acc + c[:, q:q + 1] * xq

    for ref, fn in zip(out_refs, fwd_fns):
        ref[...] = fn(acc).astype(ref.dtype)


# ----------------------------- block-size heuristic ----------------------------
def _choose_block_rows(R, L, Q, nb, n_out):
    """Largest row block (multiple of 8, <= 256) whose per-step working set fits
    a conservative scoped-VMEM budget, capped so the grid has >= 2 steps when
    there is enough work (v7x megacore)."""
    budget = 6 * 1024 * 1024                       # conservative (v5e scoped default 16 MiB)
    basis_bytes = 4 * nb * L * L                   # resident shared basis
    per_row = 4 * (2 * L + 2 * Q + 2 * n_out * L)  # double-buffered in/out blocks
    avail = max(budget - basis_bytes, 0)
    max_rows = avail // max(per_row, 1)
    r8 = _round_up(R, 8)
    block = min(256, r8, max(8, (max_rows // 8) * 8))
    if r8 >= 16:
        block = min(block, max(8, (r8 // 2 // 8) * 8))
    return max(block, 8)


# ----------------------------- wrapper -----------------------------------------
def rssm_pallas_forward(u, Lambda, W, D, *, fun_forward, fun_fit,
                        block_rows=None, interpret=False):
    """u: (B, H, L) float32. Returns (fun_forward(y), fun_fit(y)), each (B, H, L)."""
    B, H, L = u.shape
    u = u.astype(jnp.float32)

    G, C = _build_basis_and_coeffs(Lambda, W, D, L)
    nb = G.shape[0]            # 2P
    Q = C.shape[1]             # 2P + 1

    same_fun = (fun_forward == fun_fit)
    fwd_fns = ((_REALFUNS[fun_forward],) if same_fun
               else (_REALFUNS[fun_forward], _REALFUNS[fun_fit]))
    n_out = len(fwd_fns)

    # Flatten (B, H) -> rows; per-row coefficients follow the same ordering.
    R = B * H
    if block_rows is None:
        block_rows = _choose_block_rows(R, L, Q, nb, n_out)
    block_rows = max(8, (block_rows // 8) * 8)
    Rp = _round_up(R, block_rows)

    u_rows = u.reshape(R, L)                      # contiguous view, no copy
    c_rows = jnp.tile(C, (B, 1))                  # (R, Q); row r -> channel r % H
    if Rp != R:
        u_rows = jnp.pad(u_rows, ((0, Rp - R), (0, 0)))
        c_rows = jnp.pad(c_rows, ((0, Rp - R), (0, 0)))

    grid = (Rp // block_rows,)

    kernel = functools.partial(_rssm_rows_kernel, nb=nb, fwd_fns=fwd_fns)

    outs = pl.pallas_call(
        kernel,
        out_shape=tuple(jax.ShapeDtypeStruct((Rp, L), jnp.float32)
                        for _ in range(n_out)),
        grid_spec=pltpu.PrefetchScalarGridSpec(
            num_scalar_prefetch=0,
            grid=grid,
            in_specs=[
                pl.BlockSpec((block_rows, L), lambda r: (r, 0)),   # u rows
                pl.BlockSpec((nb, L, L), lambda r: (0, 0, 0)),     # shared basis (resident)
                pl.BlockSpec((block_rows, Q), lambda r: (r, 0)),   # per-row coefficients
            ],
            out_specs=[pl.BlockSpec((block_rows, L), lambda r: (r, 0))
                       for _ in range(n_out)],
        ),
        compiler_params=pltpu.CompilerParams(
            dimension_semantics=("parallel",)),
        interpret=interpret,
    )(u_rows, G, c_rows)

    def _unflatten(y):
        return y[:R].reshape(B, H, L)

    if same_fun:
        y = _unflatten(outs[0])
        return y, y
    return _unflatten(outs[0]), _unflatten(outs[1])


# ----------------------------- reference (plain JAX, FFT path) -----------------
def rssm_reference(u_bhl, Lambda, W, D, *, fun_forward, fun_fit):
    B, H, L = u_bhl.shape
    powers = _geometric_powers(Lambda, L)               # (P, L)
    K = jnp.real(W @ powers).astype(jnp.float32)        # (H, L) depthwise conv kernel
    n = 2 * L
    Kf = jnp.fft.rfft(K, n=n)                           # (H, nf)
    uf = jnp.fft.rfft(u_bhl, n=n)                       # (B, H, nf)
    conv = jnp.fft.irfft(uf * Kf[None], n=n)[..., :L]   # causal depthwise FFT conv
    y = conv + D[None, :, None] * u_bhl
    return _REALFUNS[fun_forward](y), _REALFUNS[fun_fit](y)


# ----------------------------- thin RSSM wrapper -------------------------------
class RSSM:
    def __init__(self, d_model, d_state, fun_forward, fun_fit, kernel, key):
        if kernel not in ("Vr",):
            raise ValueError("Kernel must be one of ['Vr']")
        realfuns = list(_REALFUNS.keys())
        if fun_forward not in realfuns or fun_fit not in realfuns:
            raise ValueError(f"Real Function of Complex Vars must be one of {realfuns}")
        self.d_model, self.d_state = d_model, d_state
        self.fun_forward, self.fun_fit = fun_forward, fun_fit

        k1, k2, k3, k4, k5 = jax.random.split(key, 5)
        # reservoir eigenvalues inside the unit disk (stable)
        radius = jax.random.uniform(k1, (d_state,), minval=0.5, maxval=0.95)
        theta = jax.random.uniform(k2, (d_state,), minval=0.0, maxval=jnp.pi)
        self.Lambda = (radius * jnp.exp(1j * theta)).astype(jnp.complex64)
        # combined (C * B) reservoir mixing, per (channel, state)
        w_re = jax.random.normal(k3, (d_model, d_state)) / jnp.sqrt(d_state)
        w_im = jax.random.normal(k4, (d_model, d_state)) / jnp.sqrt(d_state)
        self.W = (w_re + 1j * w_im).astype(jnp.complex64)
        # skip connection
        self.D = jax.random.normal(k5, (d_model,)).astype(jnp.float32)

    # TODO(synk): RSSM.step() (single-timestep recurrence) is not implemented; only forward().
    def __call__(self, u):
        return rssm_pallas_forward(u, self.Lambda, self.W, self.D,
                                   fun_forward=self.fun_forward, fun_fit=self.fun_fit)

    def reference(self, u):
        return rssm_reference(u, self.Lambda, self.W, self.D,
                              fun_forward=self.fun_forward, fun_fit=self.fun_fit)


# ----------------------------- main --------------------------------------------
if __name__ == "__main__":
    B, H, L, P = 2, 32, 16, 8          # batch, d_model, seq_len, d_state

    key = jax.random.PRNGKey(0)
    k_u, k_p1, k_p2 = jax.random.split(key, 3)
    u = jax.random.normal(k_u, (B, H, L), dtype=jnp.float32)

    # config 1: distinct activations -> kernel emits two outputs
    m1 = RSSM(d_model=H, d_state=P, fun_forward="real+tanh", fun_fit="real",
              kernel="Vr", key=k_p1)
    y1, z1 = jax.block_until_ready(m1(u))
    y1_ref, z1_ref = m1.reference(u)
    np.testing.assert_allclose(np.asarray(y1), np.asarray(y1_ref), rtol=5e-4, atol=5e-4)
    np.testing.assert_allclose(np.asarray(z1), np.asarray(z1_ref), rtol=5e-4, atol=5e-4)

    # config 2: identical activations -> kernel emits a single output, returned twice
    m2 = RSSM(d_model=H, d_state=P, fun_forward="real+relu", fun_fit="real+relu",
              kernel="Vr", key=k_p2)
    y2, z2 = jax.block_until_ready(m2(u))
    y2_ref, z2_ref = m2.reference(u)
    np.testing.assert_allclose(np.asarray(y2), np.asarray(y2_ref), rtol=5e-4, atol=5e-4)
    np.testing.assert_allclose(np.asarray(z2), np.asarray(z2_ref), rtol=5e-4, atol=5e-4)

    assert y1.shape == (B, H, L) and z1.shape == (B, H, L)
    assert y2.shape == (B, H, L) and z2.shape == (B, H, L)
    print("KERNEL_OK")
</pallas_src>

<mosaic_0001>
module attributes {stable_mosaic.version = 11 : i64} {
  func.func @_rssm_rows_kernel(%arg0: i32, %arg1: memref<32x16xf32, #tpu.memory_space<vmem>>, %arg2: memref<16x16x16xf32, #tpu.memory_space<vmem>>, %arg3: memref<32x17xf32, #tpu.memory_space<vmem>>, %arg4: memref<32x16xf32, #tpu.memory_space<vmem>>, %arg5: memref<32x16xf32, #tpu.memory_space<vmem>>) attributes {dimension_semantics = [#tpu.dimension_semantics<parallel>], iteration_bounds = array<i64: 2>, scalar_prefetch = 0 : i64, scratch_operands = 0 : i64, tpu.core_type = #tpu.core_type<tc>, window_params = [{transform_indices = @transform_0, window_bounds = array<i64: 32, 16>}, {pipeline_mode = #tpu.pipeline_mode<synchronous>, transform_indices = @transform_1, window_bounds = array<i64: 16, 16, 16>}, {transform_indices = @transform_2, window_bounds = array<i64: 32, 17>}, {transform_indices = @transform_3, window_bounds = array<i64: 32, 16>}, {transform_indices = @transform_4, window_bounds = array<i64: 32, 16>}]} {
    %c0 = arith.constant 0 : index
    %c0_0 = arith.constant 0 : index
    %0 = vector.load %arg1[%c0, %c0_0] : memref<32x16xf32, #tpu.memory_space<vmem>>, vector<32x16xf32>
    %c0_1 = arith.constant 0 : index
    %c0_2 = arith.constant 0 : index
    %1 = vector.load %arg3[%c0_1, %c0_2] : memref<32x17xf32, #tpu.memory_space<vmem>>, vector<32x17xf32>
    %2 = vector.extract_strided_slice %1 {offsets = [0, 16], sizes = [32, 1], strides = [1, 1]} : vector<32x17xf32> to vector<32x1xf32>
    %3 = vector.broadcast %2 : vector<32x1xf32> to vector<32x16xf32>
    %4 = arith.mulf %3, %0 : vector<32x16xf32>
    %c0_3 = arith.constant 0 : index
    %c0_4 = arith.constant 0 : index
    %c0_5 = arith.constant 0 : index
    %5 = vector.load %arg2[%c0_3, %c0_4, %c0_5] : memref<16x16x16xf32, #tpu.memory_space<vmem>>, vector<1x16x16xf32>
    %6 = vector.shape_cast %5 : vector<1x16x16xf32> to vector<16x16xf32>
    %cst = arith.constant dense<0.000000e+00> : vector<32x16xf32>
    %7 = tpu.matmul %0, %6, %cst {dimension_numbers = #tpu.dot_dimension_numbers<[1], [0], [0], [1], [0, 0, 1, 1], [], []>} : vector<32x16xf32>, vector<16x16xf32>, vector<32x16xf32> -> vector<32x16xf32>
    %8 = vector.extract_strided_slice %1 {offsets = [0, 0], sizes = [32, 1], strides = [1, 1]} : vector<32x17xf32> to vector<32x1xf32>
    %9 = vector.broadcast %8 : vector<32x1xf32> to vector<32x16xf32>
    %10 = arith.mulf %9, %7 : vector<32x16xf32>
    %11 = arith.addf %4, %10 : vector<32x16xf32>
    %c1 = arith.constant 1 : index
    %c0_6 = arith.constant 0 : index
    %c0_7 = arith.constant 0 : index
    %12 = vector.load %arg2[%c1, %c0_6, %c0_7] : memref<16x16x16xf32, #tpu.memory_space<vmem>>, vector<1x16x16xf32>
    %13 = vector.shape_cast %12 : vector<1x16x16xf32> to vector<16x16xf32>
    %cst_8 = arith.constant dense<0.000000e+00> : vector<32x16xf32>
    %14 = tpu.matmul %0, %13, %cst_8 {dimension_numbers = #tpu.dot_dimension_numbers<[1], [0], [0], [1], [0, 0, 1, 1], [], []>} : vector<32x16xf32>, vector<16x16xf32>, vector<32x16xf32> -> vector<32x16xf32>
    %15 = vector.extract_strided_slice %1 {offsets = [0, 1], sizes = [32, 1], strides = [1, 1]} : vector<32x17xf32> to vector<32x1xf32>
    %16 = vector.broadcast %15 : vector<32x1xf32> to vector<32x16xf32>
    %17 = arith.mulf %16, %14 : vector<32x16xf32>
    %18 = arith.addf %11, %17 : vector<32x16xf32>
    %c2 = arith.constant 2 : index
    %c0_9 = arith.constant 0 : index
    %c0_10 = arith.constant 0 : index
    %19 = vector.load %arg2[%c2, %c0_9, %c0_10] : memref<16x16x16xf32, #tpu.memory_space<vmem>>, vector<1x16x16xf32>
    %20 = vector.shape_cast %19 : vector<1x16x16xf32> to vector<16x16xf32>
    %cst_11 = arith.constant dense<0.000000e+00> : vector<32x16xf32>
    %21 = tpu.matmul %0, %20, %cst_11 {dimension_numbers = #tpu.dot_dimension_numbers<[1], [0], [0], [1], [0, 0, 1, 1], [], []>} : vector<32x16xf32>, vector<16x16xf32>, vector<32x16xf32> -> vector<32x16xf32>
    %22 = vector.extract_strided_slice %1 {offsets = [0, 2], sizes = [32, 1], strides = [1, 1]} : vector<32x17xf32> to vector<32x1xf32>
    %23 = vector.broadcast %22 : vector<32x1xf32> to vector<32x16xf32>
    %24 = arith.mulf %23, %21 : vector<32x16xf32>
    %25 = arith.addf %18, %24 : vector<32x16xf32>
    %c3 = arith.constant 3 : index
    %c0_12 = arith.constant 0 : index
    %c0_13 = arith.constant 0 : index
    %26 = vector.load %arg2[%c3, %c0_12, %c0_13] : memref<16x16x16xf32, #tpu.memory_space<vmem>>, vector<1x16x16xf32>
    %27 = vector.shape_cast %26 : vector<1x16x16xf32> to vector<16x16xf32>
    %cst_14 = arith.constant dense<0.000000e+00> : vector<32x16xf32>
    %28 = tpu.matmul %0, %27, %cst_14 {dimension_numbers = #tpu.dot_dimension_numbers<[1], [0], [0], [1], [0, 0, 1, 1], [], []>} : vector<32x16xf32>, vector<16x16xf32>, vector<32x16xf32> -> vector<32x16xf32>
    %29 = vector.extract_strided_slice %1 {offsets = [0, 3], sizes = [32, 1], strides = [1, 1]} : vector<32x17xf32> to vector<32x1xf32>
    %30 = vector.broadcast %29 : vector<32x1xf32> to vector<32x16xf32>
    %31 = arith.mulf %30, %28 : vector<32x16xf32>
    %32 = arith.addf %25, %31 : vector<32x16xf32>
    %c4 = arith.constant 4 : index
    %c0_15 = arith.constant 0 : index
    %c0_16 = arith.constant 0 : index
    %33 = vector.load %arg2[%c4, %c0_15, %c0_16] : memref<16x16x16xf32, #tpu.memory_space<vmem>>, vector<1x16x16xf32>
    %34 = vector.shape_cast %33 : vector<1x16x16xf32> to vector<16x16xf32>
    %cst_17 = arith.constant dense<0.000000e+00> : vector<32x16xf32>
    %35 = tpu.matmul %0, %34, %cst_17 {dimension_numbers = #tpu.dot_dimension_numbers<[1], [0], [0], [1], [0, 0, 1, 1], [], []>} : vector<32x16xf32>, vector<16x16xf32>, vector<32x16xf32> -> vector<32x16xf32>
    %36 = vector.extract_strided_slice %1 {offsets = [0, 4], sizes = [32, 1], strides = [1, 1]} : vector<32x17xf32> to vector<32x1xf32>
    %37 = vector.broadcast %36 : vector<32x1xf32> to vector<32x16xf32>
    %38 = arith.mulf %37, %35 : vector<32x16xf32>
    %39 = arith.addf %32, %38 : vector<32x16xf32>
    %c5 = arith.constant 5 : index
    %c0_18 = arith.constant 0 : index
    %c0_19 = arith.constant 0 : index
    %40 = vector.load %arg2[%c5, %c0_18, %c0_19] : memref<16x16x16xf32, #tpu.memory_space<vmem>>, vector<1x16x16xf32>
    %41 = vector.shape_cast %40 : vector<1x16x16xf32> to vector<16x16xf32>
    %cst_20 = arith.constant dense<0.000000e+00> : vector<32x16xf32>
    %42 = tpu.matmul %0, %41, %cst_20 {dimension_numbers = #tpu.dot_dimension_numbers<[1], [0], [0], [1], [0, 0, 1, 1], [], []>} : vector<32x16xf32>, vector<16x16xf32>, vector<32x16xf32> -> vector<32x16xf32>
    %43 = vector.extract_strided_slice %1 {offsets = [0, 5], sizes = [32, 1], strides = [1, 1]} : vector<32x17xf32> to vector<32x1xf32>
    %44 = vector.broadcast %43 : vector<32x1xf32> to vector<32x16xf32>
    %45 = arith.mulf %44, %42 : vector<32x16xf32>
    %46 = arith.addf %39, %45 : vector<32x16xf32>
    %c6 = arith.constant 6 : index
    %c0_21 = arith.constant 0 : index
    %c0_22 = arith.constant 0 : index
    %47 = vector.load %arg2[%c6, %c0_21, %c0_22] : memref<16x16x16xf32, #tpu.memory_space<vmem>>, vector<1x16x16xf32>
    %48 = vector.shape_cast %47 : vector<1x16x16xf32> to vector<16x16xf32>
    %cst_23 = arith.constant dense<0.000000e+00> : vector<32x16xf32>
    %49 = tpu.matmul %0, %48, %cst_23 {dimension_numbers = #tpu.dot_dimension_numbers<[1], [0], [0], [1], [0, 0, 1, 1], [], []>} : vector<32x16xf32>, vector<16x16xf32>, vector<32x16xf32> -> vector<32x16xf32>
    %50 = vector.extract_strided_slice %1 {offsets = [0, 6], sizes = [32, 1], strides = [1, 1]} : vector<32x17xf32> to vector<32x1xf32>
    %51 = vector.broadcast %50 : vector<32x1xf32> to vector<32x16xf32>
    %52 = arith.mulf %51, %49 : vector<32x16xf32>
    %53 = arith.addf %46, %52 : vector<32x16xf32>
    %c7 = arith.constant 7 : index
    %c0_24 = arith.constant 0 : index
    %c0_25 = arith.constant 0 : index
    %54 = vector.load %arg2[%c7, %c0_24, %c0_25] : memref<16x16x16xf32, #tpu.memory_space<vmem>>, vector<1x16x16xf32>
    %55 = vector.shape_cast %54 : vector<1x16x16xf32> to vector<16x16xf32>
    %cst_26 = arith.constant dense<0.000000e+00> : vector<32x16xf32>
    %56 = tpu.matmul %0, %55, %cst_26 {dimension_numbers = #tpu.dot_dimension_numbers<[1], [0], [0], [1], [0, 0, 1, 1], [], []>} : vector<32x16xf32>, vector<16x16xf32>, vector<32x16xf32> -> vector<32x16xf32>
    %57 = vector.extract_strided_slice %1 {offsets = [0, 7], sizes = [32, 1], strides = [1, 1]} : vector<32x17xf32> to vector<32x1xf32>
    %58 = vector.broadcast %57 : vector<32x1xf32> to vector<32x16xf32>
    %59 = arith.mulf %58, %56 : vector<32x16xf32>
    %60 = arith.addf %53, %59 : vector<32x16xf32>
    %c8 = arith.constant 8 : index
    %c0_27 = arith.constant 0 : index
    %c0_28 = arith.constant 0 : index
    %61 = vector.load %arg2[%c8, %c0_27, %c0_28] : memref<16x16x16xf32, #tpu.memory_space<vmem>>, vector<1x16x16xf32>
    %62 = vector.shape_cast %61 : vector<1x16x16xf32> to vector<16x16xf32>
    %cst_29 = arith.constant dense<0.000000e+00> : vector<32x16xf32>
    %63 = tpu.matmul %0, %62, %cst_29 {dimension_numbers = #tpu.dot_dimension_numbers<[1], [0], [0], [1], [0, 0, 1, 1], [], []>} : vector<32x16xf32>, vector<16x16xf32>, vector<32x16xf32> -> vector<32x16xf32>
    %64 = vector.extract_strided_slice %1 {offsets = [0, 8], sizes = [32, 1], strides = [1, 1]} : vector<32x17xf32> to vector<32x1xf32>
    %65 = vector.broadcast %64 : vector<32x1xf32> to vector<32x16xf32>
    %66 = arith.mulf %65, %63 : vector<32x16xf32>
    %67 = arith.addf %60, %66 : vector<32x16xf32>
    %c9 = arith.constant 9 : index
    %c0_30 = arith.constant 0 : index
    %c0_31 = arith.constant 0 : index
    %68 = vector.load %arg2[%c9, %c0_30, %c0_31] : memref<16x16x16xf32, #tpu.memory_space<vmem>>, vector<1x16x16xf32>
    %69 = vector.shape_cast %68 : vector<1x16x16xf32> to vector<16x16xf32>
    %cst_32 = arith.constant dense<0.000000e+00> : vector<32x16xf32>
    %70 = tpu.matmul %0, %69, %cst_32 {dimension_numbers = #tpu.dot_dimension_numbers<[1], [0], [0], [1], [0, 0, 1, 1], [], []>} : vector<32x16xf32>, vector<16x16xf32>, vector<32x16xf32> -> vector<32x16xf32>
    %71 = vector.extract_strided_slice %1 {offsets = [0, 9], sizes = [32, 1], strides = [1, 1]} : vector<32x17xf32> to vector<32x1xf32>
    %72 = vector.broadcast %71 : vector<32x1xf32> to vector<32x16xf32>
    %73 = arith.mulf %72, %70 : vector<32x16xf32>
    %74 = arith.addf %67, %73 : vector<32x16xf32>
    %c10 = arith.constant 10 : index
    %c0_33 = arith.constant 0 : index
    %c0_34 = arith.constant 0 : index
    %75 = vector.load %arg2[%c10, %c0_33, %c0_34] : memref<16x16x16xf32, #tpu.memory_space<vmem>>, vector<1x16x16xf32>
    %76 = vector.shape_cast %75 : vector<1x16x16xf32> to vector<16x16xf32>
    %cst_35 = arith.constant dense<0.000000e+00> : vector<32x16xf32>
    %77 = tpu.matmul %0, %76, %cst_35 {dimension_numbers = #tpu.dot_dimension_numbers<[1], [0], [0], [1], [0, 0, 1, 1], [], []>} : vector<32x16xf32>, vector<16x16xf32>, vector<32x16xf32> -> vector<32x16xf32>
    %78 = vector.extract_strided_slice %1 {offsets = [0, 10], sizes = [32, 1], strides = [1, 1]} : vector<32x17xf32> to vector<32x1xf32>
    %79 = vector.broadcast %78 : vector<32x1xf32> to vector<32x16xf32>
    %80 = arith.mulf %79, %77 : vector<32x16xf32>
    %81 = arith.addf %74, %80 : vector<32x16xf32>
    %c11 = arith.constant 11 : index
    %c0_36 = arith.constant 0 : index
    %c0_37 = arith.constant 0 : index
    %82 = vector.load %arg2[%c11, %c0_36, %c0_37] : memref<16x16x16xf32, #tpu.memory_space<vmem>>, vector<1x16x16xf32>
    %83 = vector.shape_cast %82 : vector<1x16x16xf32> to vector<16x16xf32>
    %cst_38 = arith.constant dense<0.000000e+00> : vector<32x16xf32>
    %84 = tpu.matmul %0, %83, %cst_38 {dimension_numbers = #tpu.dot_dimension_numbers<[1], [0], [0], [1], [0, 0, 1, 1], [], []>} : vector<32x16xf32>, vector<16x16xf32>, vector<32x16xf32> -> vector<32x16xf32>
    %85 = vector.extract_strided_slice %1 {offsets = [0, 11], sizes = [32, 1], strides = [1, 1]} : vector<32x17xf32> to vector<32x1xf32>
    %86 = vector.broadcast %85 : vector<32x1xf32> to vector<32x16xf32>
    %87 = arith.mulf %86, %84 : vector<32x16xf32>
    %88 = arith.addf %81, %87 : vector<32x16xf32>
    %c12 = arith.constant 12 : index
    %c0_39 = arith.constant 0 : index
    %c0_40 = arith.constant 0 : index
    %89 = vector.load %arg2[%c12, %c0_39, %c0_40] : memref<16x16x16xf32, #tpu.memory_space<vmem>>, vector<1x16x16xf32>
    %90 = vector.shape_cast %89 : vector<1x16x16xf32> to vector<16x16xf32>
    %cst_41 = arith.constant dense<0.000000e+00> : vector<32x16xf32>
    %91 = tpu.matmul %0, %90, %cst_41 {dimension_numbers = #tpu.dot_dimension_numbers<[1], [0], [0], [1], [0, 0, 1, 1], [], []>} : vector<32x16xf32>, vector<16x16xf32>, vector<32x16xf32> -> vector<32x16xf32>
    %92 = vector.extract_strided_slice %1 {offsets = [0, 12], sizes = [32, 1], strides = [1, 1]} : vector<32x17xf32> to vector<32x1xf32>
    %93 = vector.broadcast %92 : vector<32x1xf32> to vector<32x16xf32>
    %94 = arith.mulf %93, %91 : vector<32x16xf32>
    %95 = arith.addf %88, %94 : vector<32x16xf32>
    %c13 = arith.constant 13 : index
    %c0_42 = arith.constant 0 : index
    %c0_43 = arith.constant 0 : index
    %96 = vector.load %arg2[%c13, %c0_42, %c0_43] : memref<16x16x16xf32, #tpu.memory_space<vmem>>, vector<1x16x16xf32>
    %97 = vector.shape_cast %96 : vector<1x16x16xf32> to vector<16x16xf32>
    %cst_44 = arith.constant dense<0.000000e+00> : vector<32x16xf32>
    %98 = tpu.matmul %0, %97, %cst_44 {dimension_numbers = #tpu.dot_dimension_numbers<[1], [0], [0], [1], [0, 0, 1, 1], [], []>} : vector<32x16xf32>, vector<16x16xf32>, vector<32x16xf32> -> vector<32x16xf32>
    %99 = vector.extract_strided_slice %1 {offsets = [0, 13], sizes = [32, 1], strides = [1, 1]} : vector<32x17xf32> to vector<32x1xf32>
    %100 = vector.broadcast %99 : vector<32x1xf32> to vector<32x16xf32>
    %101 = arith.mulf %100, %98 : vector<32x16xf32>
    %102 = arith.addf %95, %101 : vector<32x16xf32>
    %c14 = arith.constant 14 : index
    %c0_45 = arith.constant 0 : index
    %c0_46 = arith.constant 0 : index
    %103 = vector.load %arg2[%c14, %c0_45, %c0_46] : memref<16x16x16xf32, #tpu.memory_space<vmem>>, vector<1x16x16xf32>
    %104 = vector.shape_cast %103 : vector<1x16x16xf32> to vector<16x16xf32>
    %cst_47 = arith.constant dense<0.000000e+00> : vector<32x16xf32>
    %105 = tpu.matmul %0, %104, %cst_47 {dimension_numbers = #tpu.dot_dimension_numbers<[1], [0], [0], [1], [0, 0, 1, 1], [], []>} : vector<32x16xf32>, vector<16x16xf32>, vector<32x16xf32> -> vector<32x16xf32>
    %106 = vector.extract_strided_slice %1 {offsets = [0, 14], sizes = [32, 1], strides = [1, 1]} : vector<32x17xf32> to vector<32x1xf32>
    %107 = vector.broadcast %106 : vector<32x1xf32> to vector<32x16xf32>
    %108 = arith.mulf %107, %105 : vector<32x16xf32>
    %109 = arith.addf %102, %108 : vector<32x16xf32>
    %c15 = arith.constant 15 : index
    %c0_48 = arith.constant 0 : index
    %c0_49 = arith.constant 0 : index
    %110 = vector.load %arg2[%c15, %c0_48, %c0_49] : memref<16x16x16xf32, #tpu.memory_space<vmem>>, vector<1x16x16xf32>
    %111 = vector.shape_cast %110 : vector<1x16x16xf32> to vector<16x16xf32>
    %cst_50 = arith.constant dense<0.000000e+00> : vector<32x16xf32>
    %112 = tpu.matmul %0, %111, %cst_50 {dimension_numbers = #tpu.dot_dimension_numbers<[1], [0], [0], [1], [0, 0, 1, 1], [], []>} : vector<32x16xf32>, vector<16x16xf32>, vector<32x16xf32> -> vector<32x16xf32>
    %113 = vector.extract_strided_slice %1 {offsets = [0, 15], sizes = [32, 1], strides = [1, 1]} : vector<32x17xf32> to vector<32x1xf32>
    %114 = vector.broadcast %113 : vector<32x1xf32> to vector<32x16xf32>
    %115 = arith.mulf %114, %112 : vector<32x16xf32>
    %116 = arith.addf %109, %115 : vector<32x16xf32>
    %117 = math.tanh %116 : vector<32x16xf32>
    %c0_51 = arith.constant 0 : index
    %c0_52 = arith.constant 0 : index
    %118 = vector.load %arg4[%c0_51, %c0_52] : memref<32x16xf32, #tpu.memory_space<vmem>>, vector<32x16xf32>
    tpu.vector_store %arg4[%c0_51, %c0_52], %117 {strides = array<i32>} : memref<32x16xf32, #tpu.memory_space<vmem>>, vector<32x16xf32>,
    %c0_53 = arith.constant 0 : index
    %c0_54 = arith.constant 0 : index
    %119 = vector.load %arg5[%c0_53, %c0_54] : memref<32x16xf32, #tpu.memory_space<vmem>>, vector<32x16xf32>
    tpu.vector_store %arg5[%c0_53, %c0_54], %116 {strides = array<i32>} : memref<32x16xf32, #tpu.memory_space<vmem>>, vector<32x16xf32>,
    return
  }
  func.func @transform_0(%arg0: i32) -> (i32, i32) {
    %c0_i32 = arith.constant 0 : i32
    %c0_i32_0 = arith.constant 0 : i32
    return %arg0, %c0_i32 : i32, i32
  }
  func.func @transform_1(%arg0: i32) -> (i32, i32, i32) {
    %c0_i32 = arith.constant 0 : i32
    %c0_i32_0 = arith.constant 0 : i32
    %c0_i32_1 = arith.constant 0 : i32
    %c0_i32_2 = arith.constant 0 : i32
    return %c0_i32, %c0_i32_0, %c0_i32_1 : i32, i32, i32
  }
  func.func @transform_2(%arg0: i32) -> (i32, i32) {
    %c0_i32 = arith.constant 0 : i32
    %c0_i32_0 = arith.constant 0 : i32
    return %arg0, %c0_i32 : i32, i32
  }
  func.func @transform_3(%arg0: i32) -> (i32, i32) {
    %c0_i32 = arith.constant 0 : i32
    %c0_i32_0 = arith.constant 0 : i32
    return %arg0, %c0_i32 : i32, i32
  }
  func.func @transform_4(%arg0: i32) -> (i32, i32) {
    %c0_i32 = arith.constant 0 : i32
    %c0_i32_0 = arith.constant 0 : i32
    return %arg0, %c0_i32 : i32, i32
  }
}

</mosaic_0001>

<llo_original>
// kernel: tpu_custom_call.1
$region0: #{tpu_custom_call.1}
  #allocation0 [shape = 'u32[]', space=smem, size = 0x4, offset = 0x4, fixed_abs, tag = 'smem constant byte address 0x4 - core index']
  #allocation1 [shape = 'u32[144,128]{1,0:T(1,128)}', space=vmem, size = 0x12000, scoped, tag = 'internal scratch']
  %s0 = inlined_call_operand.vmem [shape: f32[64,16], index: 0, kind: input, shape index: {}]
  %s1 = inlined_call_operand.hbm [shape: f32[16,16,16], index: 1, kind: input, shape index: {}]
  %s2 = inlined_call_operand.vmem [shape: f32[64,17], index: 2, kind: input, shape index: {}]
  %s3 = inlined_call_operand.vmem [shape: f32[64,16], index: 3, kind: output, shape index: {0}]
  %s4 = inlined_call_operand.vmem [shape: f32[64,16], index: 4, kind: output, shape index: {1}]
  %5 = xla_tuple %s3, %s4
  %s6 = sld [smem:[#allocation0]]
  $region57: #{tpu_custom_call.1} parent=0
    _
  %s8 = ssub.s32 1, %s6
  %s9 = scalar_select 0, %s8, %s6
  $region1: #{tpu_custom_call.1} parent=0
    #allocation2 [shape = 'u8[131072]{0}', space=vmem, size = 0x20000, scoped, tag = 'input window, operand 1, single buffered']
    #allocation3 [shape = 's32[2]{0}', space=sflag, size = 0x8, scoped, tag = 'scoped memory for tpu_custom_call.1']
    %10 = vsyncpa [#allocation3], 0
    loop: start=0, step=1, limit=4
    $region2: #{tpu_custom_call.1} parent=1 // loop_pre_header
      _
    $region3: #{tpu_custom_call.1} parent=1 // loop_header
      %s12 = sphi 0, %s16
      %p13 = scmp.ge.s32.totalorder %s12, 4
      %s22 = sphi 0, %s24
      %s25 = sphi 0, %s22
      %s26 = sphi 0, %s25
      %s42 = sphi 0, %s26
      %s46 = sphi 0, %s46
      %s48 = sphi 0, %s46
      %s49 = sphi 0, %s48
      %s63 = sphi 0, %s49
      %s69 = sphi 0, %s71
      %s72 = sphi 0, %s69
      %s73 = sphi 0, %s72
      %s89 = sphi 0, %s73
      %s95 = sphi 0, %s97
      %s98 = sphi 0, %s95
      %s99 = sphi 0, %s98
      %s115 = sphi 0, %s99
      %s121 = sphi 0, %s123
      %s124 = sphi 0, %s121
      %s125 = sphi 0, %s124
      %s141 = sphi 0, %s125
    $region4: #{tpu_custom_call.1} parent=1 // loop_header_branch
      %15 = sbr.rel (%p13) target = $region8
    $region5: #{tpu_custom_call.1} parent=1 // loop_body
      %s17 = ssub.s32 %s12, 1
      %s18 = ssub.s32 %s12, 2
      %s19 = sadd.s32 %s12, 1
      %s20 = ssub.s32 %s12, %s19
      %p21 = scmp.eq.s32.totalorder %s20, 0
      %s23 = sadd.s32 %s22, 1
      %s24 = scalar_select %p21, %s22, %s23
      %p27 = pneg %p21
      %p28 = scmp.eq.s32.totalorder %s12, 1
      %p29 = por %p27, %p28
      %p30 = scmp.ne.s32.totalorder %s22, %s25
      %p31 = scmp.eq.s32.totalorder %s12, 0
      %p32 = por %p30, %p31
      %p33 = scmp.ne.s32.totalorder %s22, %s25
      %p34 = scmp.eq.s32.totalorder %s17, 1
      %p35 = por %p33, %p34
      %p36 = scmp.ne.s32.totalorder %s25, %s26
      %p37 = scmp.eq.s32.totalorder %s17, 0
      %p38 = por %p36, %p37
      %p39 = scmp.ne.s32.totalorder %s25, %s26
      %p40 = scmp.eq.s32.totalorder %s18, 1
      %p41 = por %p39, %p40
      %p43 = scmp.ne.s32.totalorder %s26, %s42
      %p44 = scmp.eq.s32.totalorder %s18, 0
      %p45 = por %p43, %p44
      %s47 = sadd.s32 %s46, 1
      %p50 = scmp.eq.s32.totalorder %s12, 1
      %p51 = scmp.ne.s32.totalorder %s46, %s48
      %p52 = scmp.eq.s32.totalorder %s12, 0
      %p53 = por %p51, %p52
      %p54 = scmp.ne.s32.totalorder %s46, %s48
      %p55 = scmp.eq.s32.totalorder %s17, 1
      %p56 = por %p54, %p55
      %p57 = scmp.ne.s32.totalorder %s48, %s49
      %p58 = scmp.eq.s32.totalorder %s17, 0
      %p59 = por %p57, %p58
      %p60 = scmp.ne.s32.totalorder %s48, %s49
      %p61 = scmp.eq.s32.totalorder %s18, 1
      %p62 = por %p60, %p61
      %p64 = scmp.ne.s32.totalorder %s49, %s63
      %p65 = scmp.eq.s32.totalorder %s18, 0
      %p66 = por %p64, %p65
      %s67 = ssub.s32 %s12, %s19
      %p68 = scmp.eq.s32.totalorder %s67, 0
      %s70 = sadd.s32 %s69, 1
      %s71 = scalar_select %p68, %s69, %s70
      %p74 = pneg %p68
      %p75 = scmp.eq.s32.totalorder %s12, 1
      %p76 = por %p74, %p75
      %p77 = scmp.ne.s32.totalorder %s69, %s72
      %p78 = scmp.eq.s32.totalorder %s12, 0
      %p79 = por %p77, %p78
      %p80 = scmp.ne.s32.totalorder %s69, %s72
      %p81 = scmp.eq.s32.totalorder %s17, 1
      %p82 = por %p80, %p81
      %p83 = scmp.ne.s32.totalorder %s72, %s73
      %p84 = scmp.eq.s32.totalorder %s17, 0
      %p85 = por %p83, %p84
      %p86 = scmp.ne.s32.totalorder %s72, %s73
      %p87 = scmp.eq.s32.totalorder %s18, 1
      %p88 = por %p86, %p87
      %p90 = scmp.ne.s32.totalorder %s73, %s89
      %p91 = scmp.eq.s32.totalorder %s18, 0
      %p92 = por %p90, %p91
      %s93 = ssub.s32 %s12, %s19
      %p94 = scmp.eq.s32.totalorder %s93, 0
      %s96 = sadd.s32 %s95, 1
      %s97 = scalar_select %p94, %s95, %s96
      %p100 = pneg %p94
      %p101 = scmp.eq.s32.totalorder %s12, 1
      %p102 = por %p100, %p101
      %p103 = scmp.ne.s32.totalorder %s95, %s98
      %p104 = scmp.eq.s32.totalorder %s12, 0
      %p105 = por %p103, %p104
      %p106 = scmp.ne.s32.totalorder %s95, %s98
      %p107 = scmp.eq.s32.totalorder %s17, 1
      %p108 = por %p106, %p107
      %p109 = scmp.ne.s32.totalorder %s98, %s99
      %p110 = scmp.eq.s32.totalorder %s17, 0
      %p111 = por %p109, %p110
      %p112 = scmp.ne.s32.totalorder %s98, %s99
      %p113 = scmp.eq.s32.totalorder %s18, 1
      %p114 = por %p112, %p113
      %p116 = scmp.ne.s32.totalorder %s99, %s115
      %p117 = scmp.eq.s32.totalorder %s18, 0
      %p118 = por %p116, %p117
      %s119 = ssub.s32 %s12, %s19
      %p120 = scmp.eq.s32.totalorder %s119, 0
      %s122 = sadd.s32 %s121, 1
      %s123 = scalar_select %p120, %s121, %s122
      %p126 = pneg %p120
      %p127 = scmp.eq.s32.totalorder %s12, 1
      %p128 = por %p126, %p127
      %p129 = scmp.ne.s32.totalorder %s121, %s124
      %p130 = scmp.eq.s32.totalorder %s12, 0
      %p131 = por %p129, %p130
      %p132 = scmp.ne.s32.totalorder %s121, %s124
      %p133 = scmp.eq.s32.totalorder %s17, 1
      %p134 = por %p132, %p133
      %p135 = scmp.ne.s32.totalorder %s124, %s125
      %p136 = scmp.eq.s32.totalorder %s17, 0
      %p137 = por %p135, %p136
      %p138 = scmp.ne.s32.totalorder %s124, %s125
      %p139 = scmp.eq.s32.totalorder %s18, 1
      %p140 = por %p138, %p139
      %p142 = scmp.ne.s32.totalorder %s125, %s141
      %p143 = scmp.eq.s32.totalorder %s18, 0
      %p144 = por %p142, %p143
      %p145 = scmp.le.s32.totalorder 1, %s12
      %p146 = scmp.lt.s32.totalorder %s12, 3
      %p147 = pnand %p145, %p146
      %p148 = pneg %p147
      // Predicated region
      $region9: #{tpu_custom_call.1} parent=5 // pred_check
        _
      $region10: #{tpu_custom_call.1} parent=5 // pred_check_branch
        %150 = sbr.rel (%p147) target = $region12
      $region11: #{tpu_custom_call.1} parent=5 // pred_region
        %s151 = ssub.s32 %s12, 1
        // Predicated region
        $region13: #{tpu_custom_call.1} parent=11 // pred_check
          %p152 = pneg %p59
        $region14: #{tpu_custom_call.1} parent=11 // pred_check_branch
          %154 = sbr.rel (%p152) target = $region16
        $region15: #{tpu_custom_call.1} parent=11 // pred_region
          %s156 = ssub.s32 4096, 4096
          %157 = vsyncadd [#allocation3], %s156
          %s158 = sshll.u32 [#allocation2], 4
          %s159 = int_to_ptr.vmem [resolvable:$true] %s158
          %164 = dma.hbm_to_vmem [thread:$0]  %s1, 4096, %s159, [#allocation3], 128, 128, 8
        $region16: #{tpu_custom_call.1} parent=11 // pred_fallthru
          _
      $region12: #{tpu_custom_call.1} parent=5 // pred_fallthru
        _
      %p165 = scmp.lt.s32.totalorder %s12, 2
      // Predicated region
      $region17: #{tpu_custom_call.1} parent=5 // pred_check
        %p166 = pneg %p165
      $region18: #{tpu_custom_call.1} parent=5 // pred_check_branch
        %168 = sbr.rel (%p166) target = $region20
      $region19: #{tpu_custom_call.1} parent=5 // pred_region
        // Predicated region
        $region21: #{tpu_custom_call.1} parent=19 // pred_check
          %p169 = pneg %p32
        $region22: #{tpu_custom_call.1} parent=19 // pred_check_branch
          %171 = sbr.rel (%p169) target = $region24
        $region23: #{tpu_custom_call.1} parent=19 // pred_region
          %s172 = smul.u32 4, %s12
          %p173 = scmp.lt.s32.totalorder %s172, 7
          %s174 = scalar_select %p173, %s172, 7
          %s175 = smul.addr %s174, 8
          %s176 = scalar_lea.vmem %s0, %s175
          %s177 = smul.u32 4, %s12
        $region24: #{tpu_custom_call.1} parent=19 // pred_fallthru
          _
        // Predicated region
        $region25: #{tpu_custom_call.1} parent=19 // pred_check
          %p178 = pneg %p79
        $region26: #{tpu_custom_call.1} parent=19 // pred_check_branch
          %180 = sbr.rel (%p178) target = $region28
        $region27: #{tpu_custom_call.1} parent=19 // pred_region
          %s181 = smul.u32 4, %s12
          %p182 = scmp.lt.s32.totalorder %s181, 7
          %s183 = scalar_select %p182, %s181, 7
          %s184 = smul.addr %s183, 8
          %s185 = scalar_lea.vmem %s2, %s184
          %s186 = smul.u32 4, %s12
        $region28: #{tpu_custom_call.1} parent=19 // pred_fallthru
          _
      $region20: #{tpu_custom_call.1} parent=5 // pred_fallthru
        _
      %p187 = scmp.le.s32.totalorder 1, %s12
      %p188 = scmp.lt.s32.totalorder %s12, 3
      %p189 = pnand %p187, %p188
      %p190 = pneg %p189
      // Predicated region
      $region29: #{tpu_custom_call.1} parent=5 // pred_check
        _
      $region30: #{tpu_custom_call.1} parent=5 // pred_check_branch
        %192 = sbr.rel (%p189) target = $region32
      $region31: #{tpu_custom_call.1} parent=5 // pred_region
        %s193 = ssub.s32 %s12, 1
        // Predicated region
        $region33: #{tpu_custom_call.1} parent=31 // pred_check
          %p194 = pneg %p59
        $region34: #{tpu_custom_call.1} parent=31 // pred_check_branch
          %196 = sbr.rel (%p194) target = $region36
        $region35: #{tpu_custom_call.1} parent=31 // pred_region
          %197 = dma.done [#allocation3], 4096
        $region36: #{tpu_custom_call.1} parent=31 // pred_fallthru
          _
        %s198 = smul.u32 4, %s17
        %p199 = scmp.lt.s32.totalorder %s198, 7
        %s200 = scalar_select %p199, %s198, 7
        %s201 = smul.addr %s200, 8
        %s202 = scalar_lea.vmem %s0, %s201
        %p203 = pneg %p38
        %p204 = pneg %p35
        %p205 = pneg %p59
        %p206 = pneg %p56
        %s207 = smul.u32 4, %s17
        %p208 = scmp.lt.s32.totalorder %s207, 7
        %s209 = scalar_select %p208, %s207, 7
        %s210 = smul.addr %s209, 8
        %s211 = scalar_lea.vmem %s2, %s210
        %p212 = pneg %p85
        %p213 = pneg %p82
        %p214 = pneg %p111
        %p215 = pneg %p108
        %s216 = smul.u32 4, %s17
        %p217 = scmp.lt.s32.totalorder %s216, 7
        %s218 = scalar_select %p217, %s216, 7
        %s219 = smul.addr %s218, 8
        %s220 = scalar_lea.vmem %s3, %s219
        %p221 = pneg %p137
        %p222 = pneg %p134
        %s223 = smul.u32 4, %s17
        %p224 = scmp.lt.s32.totalorder %s223, 7
        %s225 = scalar_select %p224, %s223, 7
        %s226 = smul.addr %s225, 8
        %s227 = scalar_lea.vmem %s4, %s226
        %s228 = smul.u32 4, %s17
        %p229 = scmp.lt.s32.totalorder %s228, 7
        %s230 = scalar_select %p229, %s228, 7
        %s231 = smul.addr %s230, 8
        %s232 = scalar_lea.vmem %s0, %s231
        %s233 = smul.u32 4, %s17
        %s234 = smul.u32 4, %s17
        %p235 = scmp.lt.s32.totalorder %s234, 7
        %s236 = scalar_select %p235, %s234, 7
        %s237 = smul.addr %s236, 8
        %s238 = scalar_lea.vmem %s2, %s237
        %s239 = smul.u32 4, %s17
        %s240 = smul.u32 4, %s17
        %p241 = scmp.lt.s32.totalorder %s240, 7
        %s242 = scalar_select %p241, %s240, 7
        %s243 = smul.addr %s242, 8
        %s244 = scalar_lea.vmem %s3, %s243
        %s245 = smul.u32 4, %s17
        %s246 = smul.u32 4, %s17
        %p247 = scmp.lt.s32.totalorder %s246, 7
        %s248 = scalar_select %p247, %s246, 7
        %s249 = smul.addr %s248, 8
        %s250 = scalar_lea.vmem %s4, %s249
        %s251 = smul.u32 4, %s17
        %v252 = vld [vmem:[%s232] sm:$0xff]
        %v253 = vld [vmem:[%s232 + $0x8] sm:$0xff]
        %v254 = vld [vmem:[%s232 + $0x10] sm:$0xff]
        %v255 = vld [vmem:[%s232 + $0x18] sm:$0xff]
        %v256 = vld [vmem:[%s238] sm:$0xff]
        %v257 = vld [vmem:[%s238 + $0x8] sm:$0xff]
        %v258 = vld [vmem:[%s238 + $0x10] sm:$0xff]
        %v259 = vld [vmem:[%s238 + $0x18] sm:$0xff]
        %261 = vset.pattern.permute.xlu0 16
        %262 = vperm.xlu0 %261, %v256
        %v263 = vpop.permute.xlu0 %262
        %266 = vset.pattern.permute.xlu0 16
        %267 = vperm.xlu0 %266, %v257
        %v268 = vpop.permute.xlu0 %267
        %271 = vset.pattern.permute.xlu0 16
        %272 = vperm.xlu0 %271, %v258
        %v273 = vpop.permute.xlu0 %272
        %276 = vset.pattern.permute.xlu0 16
        %277 = vperm.xlu0 %276, %v259
        %v278 = vpop.permute.xlu0 %277
        %v280 = vmul.f32 %v263, %v252
        %v281 = vmul.f32 %v268, %v253
        %v282 = vmul.f32 %v273, %v254
        %v283 = vmul.f32 %v278, %v255
        %v284 = vld [vmem:[#allocation2] sm:$0xff]
        %v285 = vld [vmem:[#allocation2 + $0x8] sm:$0xff]
        %vm286 = vcmask 130048
        %v288 = vsel %vm286, %v252, 0
        %v291 = vsel %vm286, %v253, 0
        %v294 = vsel %vm286, %v254, 0
        %v297 = vsel %vm286, %v255, 0
        %299 = vmatprep.subr.mxu0 0.0
        %300 = vmatpush1.msra.mxu0 %v284
        %301 = vmatprep.subr.mxu0 0.0
        %302 = vmatpush1.msra.mxu0 %v285
        %303 = vmatprep.subr.mxu0 0.0
        %304 = vmatpush1.msra.mxu0 0.0
        %305 = vmatprep.subr.mxu0 0.0
        %306 = vmatpush1.msra.mxu0 0.0
        %307 = vmatprep.subr.mxu0 0.0
        %308 = vmatpush1.msra.mxu0 0.0
        %309 = vmatprep.subr.mxu0 0.0
        %310 = vmatpush1.msra.mxu0 0.0
        %311 = vmatprep.subr.mxu0 0.0
        %312 = vmatpush1.msra.mxu0 0.0
        %313 = vmatprep.subr.mxu0 0.0
        %314 = vmatpush1.msra.mxu0 0.0
        %315 = vmatprep.subr.mxu0 0.0
        %316 = vmatpush1.msra.mxu0 0.0
        %317 = vmatprep.subr.mxu0 0.0
        %318 = vmatpush1.msra.mxu0 0.0
        %319 = vmatprep.subr.mxu0 0.0
        %320 = vmatpush1.msra.mxu0 0.0
        %321 = vmatprep.subr.mxu0 0.0
        %322 = vmatpush1.msra.mxu0 0.0
        %323 = vmatprep.subr.mxu0 0.0
        %324 = vmatpush1.msra.mxu0 0.0
        %325 = vmatprep.subr.mxu0 0.0
        %326 = vmatpush1.msra.mxu0 0.0
        %327 = vmatprep.subr.mxu0 0.0
        %328 = vmatpush1.msra.mxu0 0.0
        %329 = vmatprep.subr.mxu0 0.0
        %330 = vmatpush1.msra.mxu0 0.0
        %331 = vmatprep.subr.mxu0 0.0
        %332 = vmatpush1.msra.mxu0 0.0
        %333 = vmatprep.subr.mxu0 0.0
        %334 = vmatpush1.msra.mxu0 0.0
        %335 = vmatprep.subr.mxu0 0.0
        %336 = vmatpush1.msra.mxu0 0.0
        %337 = vmatprep.subr.mxu0 0.0
        %338 = vmatpush1.msra.mxu0 0.0
        %339 = vmatprep.subr.mxu0 0.0
        %340 = vmatpush1.msra.mxu0 0.0
        %341 = vmatprep.subr.mxu0 0.0
        %342 = vmatpush1.msra.mxu0 0.0
        %343 = vmatprep.subr.mxu0 0.0
        %344 = vmatpush1.msra.mxu0 0.0
        %345 = vmatprep.subr.mxu0 0.0
        %346 = vmatpush1.msra.mxu0 0.0
        %347 = vmatprep.subr.mxu0 0.0
        %348 = vmatpush1.msra.mxu0 0.0
        %349 = vmatprep.subr.mxu0 0.0
        %350 = vmatpush1.msra.mxu0 0.0
        %351 = vmatprep.subr.mxu0 0.0
        %352 = vmatpush1.msra.mxu0 0.0
        %353 = vmatprep.subr.mxu0 0.0
        %354 = vmatpush1.msra.mxu0 0.0
        %355 = vmatprep.subr.mxu0 0.0
        %356 = vmatpush1.msra.mxu0 0.0
        %357 = vmatprep.subr.mxu0 0.0
        %358 = vmatpush1.msra.mxu0 0.0
        %359 = vmatprep.subr.mxu0 0.0
        %360 = vmatpush1.msra.mxu0 0.0
        %361 = vmatprep.subr.mxu0 0.0
        %362 = vmatpush1.msra.mxu0 0.0
        %363 = vmatprep.mubr.f32.mxu0 0.0
        %364 = vmatmul.mubr.f32.gmra.mrb[0].mxu0 %v288
        %v365 = vpop.f32.mrb[0].mxu0
        %v366 = vadd.f32 0.0, %v365
        %v367 = vpop.f32.mrb[0].mxu0
        %368 = vmatprep.mubr.f32.mxu0 0.0
        %369 = vmatmul.mubr.f32.gmra.mrb[0].mxu0 %v291
        %v370 = vpop.f32.mrb[0].mxu0
        %v371 = vadd.f32 0.0, %v370
        %v372 = vpop.f32.mrb[0].mxu0
        %373 = vmatprep.mubr.f32.mxu0 0.0
        %374 = vmatmul.mubr.f32.gmra.mrb[0].mxu0 %v294
        %v375 = vpop.f32.mrb[0].mxu0
        %v376 = vadd.f32 0.0, %v375
        %v377 = vpop.f32.mrb[0].mxu0
        %378 = vmatprep.mubr.f32.mxu0 0.0
        %379 = vmatmul.mubr.f32.gmra.mrb[0].mxu0 %v297
        %v380 = vpop.f32.mrb[0].mxu0
        %v381 = vadd.f32 0.0, %v380
        %v382 = vpop.f32.mrb[0].mxu0
        %383 = vdwg.mxu0
        %384 = vset.pattern.permute.xlu0 0
        %385 = vperm.xlu0 %384, %v256
        %v386 = vpop.permute.xlu0 %385
        %388 = vset.pattern.permute.xlu0 0
        %389 = vperm.xlu0 %388, %v257
        %v390 = vpop.permute.xlu0 %389
        %392 = vset.pattern.permute.xlu0 0
        %393 = vperm.xlu0 %392, %v258
        %v394 = vpop.permute.xlu0 %393
        %396 = vset.pattern.permute.xlu0 0
        %397 = vperm.xlu0 %396, %v259
        %v398 = vpop.permute.xlu0 %397
        %v400 = vmul.f32 %v386, %v366
        %v401 = vmul.f32 %v390, %v371
        %v402 = vmul.f32 %v394, %v376
        %v403 = vmul.f32 %v398, %v381
        %v404 = vadd.f32 %v280, %v400
        %v405 = vadd.f32 %v281, %v401
        %v406 = vadd.f32 %v282, %v402
        %v407 = vadd.f32 %v283, %v403
        %s408 = scalar_lea.vmem [#allocation2], 16
        %v409 = vld [vmem:[%s408] sm:$0xff]
        %v410 = vld [vmem:[%s408 + $0x8] sm:$0xff]
        %411 = vmatprep.subr.mxu0 0.0
        %412 = vmatpush1.msra.mxu0 %v409
        %413 = vmatprep.subr.mxu0 0.0
        %414 = vmatpush1.msra.mxu0 %v410
        %415 = vmatprep.subr.mxu0 0.0
        %416 = vmatpush1.msra.mxu0 0.0
        %417 = vmatprep.subr.mxu0 0.0
        %418 = vmatpush1.msra.mxu0 0.0
        %419 = vmatprep.subr.mxu0 0.0
        %420 = vmatpush1.msra.mxu0 0.0
        %421 = vmatprep.subr.mxu0 0.0
        %422 = vmatpush1.msra.mxu0 0.0
        %423 = vmatprep.subr.mxu0 0.0
        %424 = vmatpush1.msra.mxu0 0.0
        %425 = vmatprep.subr.mxu0 0.0
        %426 = vmatpush1.msra.mxu0 0.0
        %427 = vmatprep.subr.mxu0 0.0
        %428 = vmatpush1.msra.mxu0 0.0
        %429 = vmatprep.subr.mxu0 0.0
        %430 = vmatpush1.msra.mxu0 0.0
        %431 = vmatprep.subr.mxu0 0.0
        %432 = vmatpush1.msra.mxu0 0.0
        %433 = vmatprep.subr.mxu0 0.0
        %434 = vmatpush1.msra.mxu0 0.0
        %435 = vmatprep.subr.mxu0 0.0
        %436 = vmatpush1.msra.mxu0 0.0
        %437 = vmatprep.subr.mxu0 0.0
        %438 = vmatpush1.msra.mxu0 0.0
        %439 = vmatprep.subr.mxu0 0.0
        %440 = vmatpush1.msra.mxu0 0.0
        %441 = vmatprep.subr.mxu0 0.0
        %442 = vmatpush1.msra.mxu0 0.0
        %443 = vmatprep.subr.mxu0 0.0
        %444 = vmatpush1.msra.mxu0 0.0
        %445 = vmatprep.subr.mxu0 0.0
        %446 = vmatpush1.msra.mxu0 0.0
        %447 = vmatprep.subr.mxu0 0.0
        %448 = vmatpush1.msra.mxu0 0.0
        %449 = vmatprep.subr.mxu0 0.0
        %450 = vmatpush1.msra.mxu0 0.0
        %451 = vmatprep.subr.mxu0 0.0
        %452 = vmatpush1.msra.mxu0 0.0
        %453 = vmatprep.subr.mxu0 0.0
        %454 = vmatpush1.msra.mxu0 0.0
        %455 = vmatprep.subr.mxu0 0.0
        %456 = vmatpush1.msra.mxu0 0.0
        %457 = vmatprep.subr.mxu0 0.0
        %458 = vmatpush1.msra.mxu0 0.0
        %459 = vmatprep.subr.mxu0 0.0
        %460 = vmatpush1.msra.mxu0 0.0
        %461 = vmatprep.subr.mxu0 0.0
        %462 = vmatpush1.msra.mxu0 0.0
        %463 = vmatprep.subr.mxu0 0.0
        %464 = vmatpush1.msra.mxu0 0.0
        %465 = vmatprep.subr.mxu0 0.0
        %466 = vmatpush1.msra.mxu0 0.0
        %467 = vmatprep.subr.mxu0 0.0
        %468 = vmatpush1.msra.mxu0 0.0
        %469 = vmatprep.subr.mxu0 0.0
        %470 = vmatpush1.msra.mxu0 0.0
        %471 = vmatprep.subr.mxu0 0.0
        %472 = vmatpush1.msra.mxu0 0.0
        %473 = vmatprep.subr.mxu0 0.0
        %474 = vmatpush1.msra.mxu0 0.0
        %475 = vmatprep.mubr.f32.mxu0 0.0
        %476 = vmatmul.mubr.f32.gmra.mrb[0].mxu0 %v288
        %v477 = vpop.f32.mrb[0].mxu0
        %v478 = vadd.f32 0.0, %v477
        %v479 = vpop.f32.mrb[0].mxu0
        %480 = vmatprep.mubr.f32.mxu0 0.0
        %481 = vmatmul.mubr.f32.gmra.mrb[0].mxu0 %v291
        %v482 = vpop.f32.mrb[0].mxu0
        %v483 = vadd.f32 0.0, %v482
        %v484 = vpop.f32.mrb[0].mxu0
        %485 = vmatprep.mubr.f32.mxu0 0.0
        %486 = vmatmul.mubr.f32.gmra.mrb[0].mxu0 %v294
        %v487 = vpop.f32.mrb[0].mxu0
        %v488 = vadd.f32 0.0, %v487
        %v489 = vpop.f32.mrb[0].mxu0
        %490 = vmatprep.mubr.f32.mxu0 0.0
        %491 = vmatmul.mubr.f32.gmra.mrb[0].mxu0 %v297
        %v492 = vpop.f32.mrb[0].mxu0
        %v493 = vadd.f32 0.0, %v492
        %v494 = vpop.f32.mrb[0].mxu0
        %495 = vdwg.mxu0
        %496 = vset.pattern.permute.xlu0 1
        %497 = vperm.xlu0 %496, %v256
        %v498 = vpop.permute.xlu0 %497
        %500 = vset.pattern.permute.xlu0 1
        %501 = vperm.xlu0 %500, %v257
        %v502 = vpop.permute.xlu0 %501
        %504 = vset.pattern.permute.xlu0 1
        %505 = vperm.xlu0 %504, %v258
        %v506 = vpop.permute.xlu0 %505
        %508 = vset.pattern.permute.xlu0 1
        %509 = vperm.xlu0 %508, %v259
        %v510 = vpop.permute.xlu0 %509
        %v512 = vmul.f32 %v498, %v478
        %v513 = vmul.f32 %v502, %v483
        %v514 = vmul.f32 %v506, %v488
        %v515 = vmul.f32 %v510, %v493
        %v516 = vadd.f32 %v404, %v512
        %v517 = vadd.f32 %v405, %v513
        %v518 = vadd.f32 %v406, %v514
        %v519 = vadd.f32 %v407, %v515
        %s520 = scalar_lea.vmem [#allocation2], 32
        %v521 = vld [vmem:[%s520] sm:$0xff]
        %v522 = vld [vmem:[%s520 + $0x8] sm:$0xff]
        %523 = vmatprep.subr.mxu0 0.0
        %524 = vmatpush1.msra.mxu0 %v521
        %525 = vmatprep.subr.mxu0 0.0
        %526 = vmatpush1.msra.mxu0 %v522
        %527 = vmatprep.subr.mxu0 0.0
        %528 = vmatpush1.msra.mxu0 0.0
        %529 = vmatprep.subr.mxu0 0.0
        %530 = vmatpush1.msra.mxu0 0.0
        %531 = vmatprep.subr.mxu0 0.0
        %532 = vmatpush1.msra.mxu0 0.0
        %533 = vmatprep.subr.mxu0 0.0
        %534 = vmatpush1.msra.mxu0 0.0
        %535 = vmatprep.subr.mxu0 0.0
        %536 = vmatpush1.msra.mxu0 0.0
        %537 = vmatprep.subr.mxu0 0.0
        %538 = vmatpush1.msra.mxu0 0.0
        %539 = vmatprep.subr.mxu0 0.0
        %540 = vmatpush1.msra.mxu0 0.0
        %541 = vmatprep.subr.mxu0 0.0
        %542 = vmatpush1.msra.mxu0 0.0
        %543 = vmatprep.subr.mxu0 0.0
        %544 = vmatpush1.msra.mxu0 0.0
        %545 = vmatprep.subr.mxu0 0.0
        %546 = vmatpush1.msra.mxu0 0.0
        %547 = vmatprep.subr.mxu0 0.0
        %548 = vmatpush1.msra.mxu0 0.0
        %549 = vmatprep.subr.mxu0 0.0
        %550 = vmatpush1.msra.mxu0 0.0
        %551 = vmatprep.subr.mxu0 0.0
        %552 = vmatpush1.msra.mxu0 0.0
        %553 = vmatprep.subr.mxu0 0.0
        %554 = vmatpush1.msra.mxu0 0.0
        %555 = vmatprep.subr.mxu0 0.0
        %556 = vmatpush1.msra.mxu0 0.0
        %557 = vmatprep.subr.mxu0 0.0
        %558 = vmatpush1.msra.mxu0 0.0
        %559 = vmatprep.subr.mxu0 0.0
        %560 = vmatpush1.msra.mxu0 0.0
        %561 = vmatprep.subr.mxu0 0.0
        %562 = vmatpush1.msra.mxu0 0.0
        %563 = vmatprep.subr.mxu0 0.0
        %564 = vmatpush1.msra.mxu0 0.0
        %565 = vmatprep.subr.mxu0 0.0
        %566 = vmatpush1.msra.mxu0 0.0
        %567 = vmatprep.subr.mxu0 0.0
        %568 = vmatpush1.msra.mxu0 0.0
        %569 = vmatprep.subr.mxu0 0.0
        %570 = vmatpush1.msra.mxu0 0.0
        %571 = vmatprep.subr.mxu0 0.0
        %572 = vmatpush1.msra.mxu0 0.0
        %573 = vmatprep.subr.mxu0 0.0
        %574 = vmatpush1.msra.mxu0 0.0
        %575 = vmatprep.subr.mxu0 0.0
        %576 = vmatpush1.msra.mxu0 0.0
        %577 = vmatprep.subr.mxu0 0.0
        %578 = vmatpush1.msra.mxu0 0.0
        %579 = vmatprep.subr.mxu0 0.0
        %580 = vmatpush1.msra.mxu0 0.0
        %581 = vmatprep.subr.mxu0 0.0
        %582 = vmatpush1.msra.mxu0 0.0
        %583 = vmatprep.subr.mxu0 0.0
        %584 = vmatpush1.msra.mxu0 0.0
        %585 = vmatprep.subr.mxu0 0.0
        %586 = vmatpush1.msra.mxu0 0.0
        %587 = vmatprep.mubr.f32.mxu0 0.0
        %588 = vmatmul.mubr.f32.gmra.mrb[0].mxu0 %v288
        %v589 = vpop.f32.mrb[0].mxu0
        %v590 = vadd.f32 0.0, %v589
        %v591 = vpop.f32.mrb[0].mxu0
        %592 = vmatprep.mubr.f32.mxu0 0.0
        %593 = vmatmul.mubr.f32.gmra.mrb[0].mxu0 %v291
        %v594 = vpop.f32.mrb[0].mxu0
        %v595 = vadd.f32 0.0, %v594
        %v596 = vpop.f32.mrb[0].mxu0
        %597 = vmatprep.mubr.f32.mxu0 0.0
        %598 = vmatmul.mubr.f32.gmra.mrb[0].mxu0 %v294
        %v599 = vpop.f32.mrb[0].mxu0
        %v600 = vadd.f32 0.0, %v599
        %v601 = vpop.f32.mrb[0].mxu0
        %602 = vmatprep.mubr.f32.mxu0 0.0
        %603 = vmatmul.mubr.f32.gmra.mrb[0].mxu0 %v297
        %v604 = vpop.f32.mrb[0].mxu0
        %v605 = vadd.f32 0.0, %v604
        %v606 = vpop.f32.mrb[0].mxu0
        %607 = vdwg.mxu0
        %608 = vset.pattern.permute.xlu0 2
        %609 = vperm.xlu0 %608, %v256
        %v610 = vpop.permute.xlu0 %609
        %612 = vset.pattern.permute.xlu0 2
        %613 = vperm.xlu0 %612, %v257
        %v614 = vpop.permute.xlu0 %613
        %616 = vset.pattern.permute.xlu0 2
        %617 = vperm.xlu0 %616, %v258
        %v618 = vpop.permute.xlu0 %617
        %620 = vset.pattern.permute.xlu0 2
        %621 = vperm.xlu0 %620, %v259
        %v622 = vpop.permute.xlu0 %621
        %v624 = vmul.f32 %v610, %v590
        %v625 = vmul.f32 %v614, %v595
        %v626 = vmul.f32 %v618, %v600
        %v627 = vmul.f32 %v622, %v605
        %v628 = vadd.f32 %v516, %v624
        %v629 = vadd.f32 %v517, %v625
        %v630 = vadd.f32 %v518, %v626
        %v631 = vadd.f32 %v519, %v627
        %s632 = scalar_lea.vmem [#allocation2], 48
        %v633 = vld [vmem:[%s632] sm:$0xff]
        %v634 = vld [vmem:[%s632 + $0x8] sm:$0xff]
        %635 = vmatprep.subr.mxu0 0.0
        %636 = vmatpush1.msra.mxu0 %v633
        %637 = vmatprep.subr.mxu0 0.0
        %638 = vmatpush1.msra.mxu0 %v634
        %639 = vmatprep.subr.mxu0 0.0
        %640 = vmatpush1.msra.mxu0 0.0
        %641 = vmatprep.subr.mxu0 0.0
        %642 = vmatpush1.msra.mxu0 0.0
        %643 = vmatprep.subr.mxu0 0.0
        %644 = vmatpush1.msra.mxu0 0.0
        %645 = vmatprep.subr.mxu0 0.0
        %646 = vmatpush1.msra.mxu0 0.0
        %647 = vmatprep.subr.mxu0 0.0
        %648 = vmatpush1.msra.mxu0 0.0
        %649 = vmatprep.subr.mxu0 0.0
        %650 = vmatpush1.msra.mxu0 0.0
        %651 = vmatprep.subr.mxu0 0.0
        %652 = vmatpush1.msra.mxu0 0.0
        %653 = vmatprep.subr.mxu0 0.0
        %654 = vmatpush1.msra.mxu0 0.0
        %655 = vmatprep.subr.mxu0 0.0
        %656 = vmatpush1.msra.mxu0 0.0
        %657 = vmatprep.subr.mxu0 0.0
        %658 = vmatpush1.msra.mxu0 0.0
        %659 = vmatprep.subr.mxu0 0.0
        %660 = vmatpush1.msra.mxu0 0.0
        %661 = vmatprep.subr.mxu0 0.0
        %662 = vmatpush1.msra.mxu0 0.0
        %663 = vmatprep.subr.mxu0 0.0
        %664 = vmatpush1.msra.mxu0 0.0
        %665 = vmatprep.subr.mxu0 0.0
        %666 = vmatpush1.msra.mxu0 0.0
        %667 = vmatprep.subr.mxu0 0.0
        %668 = vmatpush1.msra.mxu0 0.0
        %669 = vmatprep.subr.mxu0 0.0
        %670 = vmatpush1.msra.mxu0 0.0
        %671 = vmatprep.subr.mxu0 0.0
        %672 = vmatpush1.msra.mxu0 0.0
        %673 = vmatprep.subr.mxu0 0.0
        %674 = vmatpush1.msra.mxu0 0.0
        %675 = vmatprep.subr.mxu0 0.0
        %676 = vmatpush1.msra.mxu0 0.0
        %677 = vmatprep.subr.mxu0 0.0
        %678 = vmatpush1.msra.mxu0 0.0
        %679 = vmatprep.subr.mxu0 0.0
        %680 = vmatpush1.msra.mxu0 0.0
        %681 = vmatprep.subr.mxu0 0.0
        %682 = vmatpush1.msra.mxu0 0.0
        %683 = vmatprep.subr.mxu0 0.0
        %684 = vmatpush1.msra.mxu0 0.0
        %685 = vmatprep.subr.mxu0 0.0
        %686 = vmatpush1.msra.mxu0 0.0
        %687 = vmatprep.subr.mxu0 0.0
        %688 = vmatpush1.msra.mxu0 0.0
        %689 = vmatprep.subr.mxu0 0.0
        %690 = vmatpush1.msra.mxu0 0.0
        %691 = vmatprep.subr.mxu0 0.0
        %692 = vmatpush1.msra.mxu0 0.0
        %693 = vmatprep.subr.mxu0 0.0
        %694 = vmatpush1.msra.mxu0 0.0
        %695 = vmatprep.subr.mxu0 0.0
        %696 = vmatpush1.msra.mxu0 0.0
        %697 = vmatprep.subr.mxu0 0.0
        %698 = vmatpush1.msra.mxu0 0.0
        %699 = vmatprep.mubr.f32.mxu0 0.0
        %700 = vmatmul.mubr.f32.gmra.mrb[0].mxu0 %v288
        %v701 = vpop.f32.mrb[0].mxu0
        %v702 = vadd.f32 0.0, %v701
        %v703 = vpop.f32.mrb[0].mxu0
        %704 = vmatprep.mubr.f32.mxu0 0.0
        %705 = vmatmul.mubr.f32.gmra.mrb[0].mxu0 %v291
        %v706 = vpop.f32.mrb[0].mxu0
        %v707 = vadd.f32 0.0, %v706
        %v708 = vpop.f32.mrb[0].mxu0
        %709 = vmatprep.mubr.f32.mxu0 0.0
        %710 = vmatmul.mubr.f32.gmra.mrb[0].mxu0 %v294
        %v711 = vpop.f32.mrb[0].mxu0
        %v712 = vadd.f32 0.0, %v711
        %v713 = vpop.f32.mrb[0].mxu0
        %714 = vmatprep.mubr.f32.mxu0 0.0
        %715 = vmatmul.mubr.f32.gmra.mrb[0].mxu0 %v297
        %v716 = vpop.f32.mrb[0].mxu0
        %v717 = vadd.f32 0.0, %v716
        %v718 = vpop.f32.mrb[0].mxu0
        %719 = vdwg.mxu0
        %720 = vset.pattern.permute.xlu0 3
        %721 = vperm.xlu0 %720, %v256
        %v722 = vpop.permute.xlu0 %721
        %724 = vset.pattern.permute.xlu0 3
        %725 = vperm.xlu0 %724, %v257
        %v726 = vpop.permute.xlu0 %725
        %728 = vset.pattern.permute.xlu0 3
        %729 = vperm.xlu0 %728, %v258
        %v730 = vpop.permute.xlu0 %729
        %732 = vset.pattern.permute.xlu0 3
        %733 = vperm.xlu0 %732, %v259
        %v734 = vpop.permute.xlu0 %733
        %v736 = vmul.f32 %v722, %v702
        %v737 = vmul.f32 %v726, %v707
        %v738 = vmul.f32 %v730, %v712
        %v739 = vmul.f32 %v734, %v717
        %v740 = vadd.f32 %v628, %v736
        %v741 = vadd.f32 %v629, %v737
        %v742 = vadd.f32 %v630, %v738
        %v743 = vadd.f32 %v631, %v739
        %s744 = scalar_lea.vmem [#allocation2], 64
        %v745 = vld [vmem:[%s744] sm:$0xff]
        %v746 = vld [vmem:[%s744 + $0x8] sm:$0xff]
        %747 = vmatprep.subr.mxu0 0.0
        %748 = vmatpush1.msra.mxu0 %v745
        %749 = vmatprep.subr.mxu0 0.0
        %750 = vmatpush1.msra.mxu0 %v746
        %751 = vmatprep.subr.mxu0 0.0
        %752 = vmatpush1.msra.mxu0 0.0
        %753 = vmatprep.subr.mxu0 0.0
        %754 = vmatpush1.msra.mxu0 0.0
        %755 = vmatprep.subr.mxu0 0.0
        %756 = vmatpush1.msra.mxu0 0.0
        %757 = vmatprep.subr.mxu0 0.0
        %758 = vmatpush1.msra.mxu0 0.0
        %759 = vmatprep.subr.mxu0 0.0
        %760 = vmatpush1.msra.mxu0 0.0
        %761 = vmatprep.subr.mxu0 0.0
        %762 = vmatpush1.msra.mxu0 0.0
        %763 = vmatprep.subr.mxu0 0.0
        %764 = vmatpush1.msra.mxu0 0.0
        %765 = vmatprep.subr.mxu0 0.0
        %766 = vmatpush1.msra.mxu0 0.0
        %767 = vmatprep.subr.mxu0 0.0
        %768 = vmatpush1.msra.mxu0 0.0
        %769 = vmatprep.subr.mxu0 0.0
        %770 = vmatpush1.msra.mxu0 0.0
        %771 = vmatprep.subr.mxu0 0.0
        %772 = vmatpush1.msra.mxu0 0.0
        %773 = vmatprep.subr.mxu0 0.0
        %774 = vmatpush1.msra.mxu0 0.0
        %775 = vmatprep.subr.mxu0 0.0
        %776 = vmatpush1.msra.mxu0 0.0
        %777 = vmatprep.subr.mxu0 0.0
        %778 = vmatpush1.msra.mxu0 0.0
        %779 = vmatprep.subr.mxu0 0.0
        %780 = vmatpush1.msra.mxu0 0.0
        %781 = vmatprep.subr.mxu0 0.0
        %782 = vmatpush1.msra.mxu0 0.0
        %783 = vmatprep.subr.mxu0 0.0
        %784 = vmatpush1.msra.mxu0 0.0
        %785 = vmatprep.subr.mxu0 0.0
        %786 = vmatpush1.msra.mxu0 0.0
        %787 = vmatprep.subr.mxu0 0.0
        %788 = vmatpush1.msra.mxu0 0.0
        %789 = vmatprep.subr.mxu0 0.0
        %790 = vmatpush1.msra.mxu0 0.0
        %791 = vmatprep.subr.mxu0 0.0
        %792 = vmatpush1.msra.mxu0 0.0
        %793 = vmatprep.subr.mxu0 0.0
        %794 = vmatpush1.msra.mxu0 0.0
        %795 = vmatprep.subr.mxu0 0.0
        %796 = vmatpush1.msra.mxu0 0.0
        %797 = vmatprep.subr.mxu0 0.0
        %798 = vmatpush1.msra.mxu0 0.0
        %799 = vmatprep.subr.mxu0 0.0
        %800 = vmatpush1.msra.mxu0 0.0
        %801 = vmatprep.subr.mxu0 0.0
        %802 = vmatpush1.msra.mxu0 0.0
        %803 = vmatprep.subr.mxu0 0.0
        %804 = vmatpush1.msra.mxu0 0.0
        %805 = vmatprep.subr.mxu0 0.0
        %806 = vmatpush1.msra.mxu0 0.0
        %807 = vmatprep.subr.mxu0 0.0
        %808 = vmatpush1.msra.mxu0 0.0
        %809 = vmatprep.subr.mxu0 0.0
        %810 = vmatpush1.msra.mxu0 0.0
        %811 = vmatprep.mubr.f32.mxu0 0.0
        %812 = vmatmul.mubr.f32.gmra.mrb[0].mxu0 %v288
        %v813 = vpop.f32.mrb[0].mxu0
        %v814 = vadd.f32 0.0, %v813
        %v815 = vpop.f32.mrb[0].mxu0
        %816 = vmatprep.mubr.f32.mxu0 0.0
        %817 = vmatmul.mubr.f32.gmra.mrb[0].mxu0 %v291
        %v818 = vpop.f32.mrb[0].mxu0
        %v819 = vadd.f32 0.0, %v818
        %v820 = vpop.f32.mrb[0].mxu0
        %821 = vmatprep.mubr.f32.mxu0 0.0
        %822 = vmatmul.mubr.f32.gmra.mrb[0].mxu0 %v294
        %v823 = vpop.f32.mrb[0].mxu0
        %v824 = vadd.f32 0.0, %v823
        %v825 = vpop.f32.mrb[0].mxu0
        %826 = vmatprep.mubr.f32.mxu0 0.0
        %827 = vmatmul.mubr.f32.gmra.mrb[0].mxu0 %v297
        %v828 = vpop.f32.mrb[0].mxu0
        %v829 = vadd.f32 0.0, %v828
        %v830 = vpop.f32.mrb[0].mxu0
        %831 = vdwg.mxu0
        %832 = vset.pattern.permute.xlu0 4
        %833 = vperm.xlu0 %832, %v256
        %v834 = vpop.permute.xlu0 %833
        %836 = vset.pattern.permute.xlu0 4
        %837 = vperm.xlu0 %836, %v257
        %v838 = vpop.permute.xlu0 %837
        %840 = vset.pattern.permute.xlu0 4
        %841 = vperm.xlu0 %840, %v258
        %v842 = vpop.permute.xlu0 %841
        %844 = vset.pattern.permute.xlu0 4
        %845 = vperm.xlu0 %844, %v259
        %v846 = vpop.permute.xlu0 %845
        %v848 = vmul.f32 %v834, %v814
        %v849 = vmul.f32 %v838, %v819
        %v850 = vmul.f32 %v842, %v824
        %v851 = vmul.f32 %v846, %v829
        %v852 = vadd.f32 %v740, %v848
        %v853 = vadd.f32 %v741, %v849
        %v854 = vadd.f32 %v742, %v850
        %v855 = vadd.f32 %v743, %v851
        %s856 = scalar_lea.vmem [#allocation2], 80
        %v857 = vld [vmem:[%s856] sm:$0xff]
        %v858 = vld [vmem:[%s856 + $0x8] sm:$0xff]
        %859 = vmatprep.subr.mxu0 0.0
        %860 = vmatpush1.msra.mxu0 %v857
        %861 = vmatprep.subr.mxu0 0.0
        %862 = vmatpush1.msra.mxu0 %v858
        %863 = vmatprep.subr.mxu0 0.0
        %864 = vmatpush1.msra.mxu0 0.0
        %865 = vmatprep.subr.mxu0 0.0
        %866 = vmatpush1.msra.mxu0 0.0
        %867 = vmatprep.subr.mxu0 0.0
        %868 = vmatpush1.msra.mxu0 0.0
        %869 = vmatprep.subr.mxu0 0.0
        %870 = vmatpush1.msra.mxu0 0.0
        %871 = vmatprep.subr.mxu0 0.0
        %872 = vmatpush1.msra.mxu0 0.0
        %873 = vmatprep.subr.mxu0 0.0
        %874 = vmatpush1.msra.mxu0 0.0
        %875 = vmatprep.subr.mxu0 0.0
        %876 = vmatpush1.msra.mxu0 0.0
        %877 = vmatprep.subr.mxu0 0.0
        %878 = vmatpush1.msra.mxu0 0.0
        %879 = vmatprep.subr.mxu0 0.0
        %880 = vmatpush1.msra.mxu0 0.0
        %881 = vmatprep.subr.mxu0 0.0
        %882 = vmatpush1.msra.mxu0 0.0
        %883 = vmatprep.subr.mxu0 0.0
        %884 = vmatpush1.msra.mxu0 0.0
        %885 = vmatprep.subr.mxu0 0.0
        %886 = vmatpush1.msra.mxu0 0.0
        %887 = vmatprep.subr.mxu0 0.0
        %888 = vmatpush1.msra.mxu0 0.0
        %889 = vmatprep.subr.mxu0 0.0
        %890 = vmatpush1.msra.mxu0 0.0
        %891 = vmatprep.subr.mxu0 0.0
        %892 = vmatpush1.msra.mxu0 0.0
        %893 = vmatprep.subr.mxu0 0.0
        %894 = vmatpush1.msra.mxu0 0.0
        %895 = vmatprep.subr.mxu0 0.0
        %896 = vmatpush1.msra.mxu0 0.0
        %897 = vmatprep.subr.mxu0 0.0
        %898 = vmatpush1.msra.mxu0 0.0
        %899 = vmatprep.subr.mxu0 0.0
        %900 = vmatpush1.msra.mxu0 0.0
        %901 = vmatprep.subr.mxu0 0.0
        %902 = vmatpush1.msra.mxu0 0.0
        %903 = vmatprep.subr.mxu0 0.0
        %904 = vmatpush1.msra.mxu0 0.0
        %905 = vmatprep.subr.mxu0 0.0
        %906 = vmatpush1.msra.mxu0 0.0
        %907 = vmatprep.subr.mxu0 0.0
        %908 = vmatpush1.msra.mxu0 0.0
        %909 = vmatprep.subr.mxu0 0.0
        %910 = vmatpush1.msra.mxu0 0.0
        %911 = vmatprep.subr.mxu0 0.0
        %912 = vmatpush1.msra.mxu0 0.0
        %913 = vmatprep.subr.mxu0 0.0
        %914 = vmatpush1.msra.mxu0 0.0
        %915 = vmatprep.subr.mxu0 0.0
        %916 = vmatpush1.msra.mxu0 0.0
        %917 = vmatprep.subr.mxu0 0.0
        %918 = vmatpush1.msra.mxu0 0.0
        %919 = vmatprep.subr.mxu0 0.0
        %920 = vmatpush1.msra.mxu0 0.0
        %921 = vmatprep.subr.mxu0 0.0
        %922 = vmatpush1.msra.mxu0 0.0
        %923 = vmatprep.mubr.f32.mxu0 0.0
        %924 = vmatmul.mubr.f32.gmra.mrb[0].mxu0 %v288
        %v925 = vpop.f32.mrb[0].mxu0
        %v926 = vadd.f32 0.0, %v925
        %v927 = vpop.f32.mrb[0].mxu0
        %928 = vmatprep.mubr.f32.mxu0 0.0
        %929 = vmatmul.mubr.f32.gmra.mrb[0].mxu0 %v291
        %v930 = vpop.f32.mrb[0].mxu0
        %v931 = vadd.f32 0.0, %v930
        %v932 = vpop.f32.mrb[0].mxu0
        %933 = vmatprep.mubr.f32.mxu0 0.0
        %934 = vmatmul.mubr.f32.gmra.mrb[0].mxu0 %v294
        %v935 = vpop.f32.mrb[0].mxu0
        %v936 = vadd.f32 0.0, %v935
        %v937 = vpop.f32.mrb[0].mxu0
        %938 = vmatprep.mubr.f32.mxu0 0.0
        %939 = vmatmul.mubr.f32.gmra.mrb[0].mxu0 %v297
        %v940 = vpop.f32.mrb[0].mxu0
        %v941 = vadd.f32 0.0, %v940
        %v942 = vpop.f32.mrb[0].mxu0
        %943 = vdwg.mxu0
        %944 = vset.pattern.permute.xlu0 5
        %945 = vperm.xlu0 %944, %v256
        %v946 = vpop.permute.xlu0 %945
        %948 = vset.pattern.permute.xlu0 5
        %949 = vperm.xlu0 %948, %v257
        %v950 = vpop.permute.xlu0 %949
        %952 = vset.pattern.permute.xlu0 5
        %953 = vperm.xlu0 %952, %v258
        %v954 = vpop.permute.xlu0 %953
        %956 = vset.pattern.permute.xlu0 5
        %957 = vperm.xlu0 %956, %v259
        %v958 = vpop.permute.xlu0 %957
        %v960 = vmul.f32 %v946, %v926
        %v961 = vmul.f32 %v950, %v931
        %v962 = vmul.f32 %v954, %v936
        %v963 = vmul.f32 %v958, %v941
        %v964 = vadd.f32 %v852, %v960
        %v965 = vadd.f32 %v853, %v961
        %v966 = vadd.f32 %v854, %v962
        %v967 = vadd.f32 %v855, %v963
        %s968 = scalar_lea.vmem [#allocation2], 96
        %v969 = vld [vmem:[%s968] sm:$0xff]
        %v970 = vld [vmem:[%s968 + $0x8] sm:$0xff]
        %971 = vmatprep.subr.mxu0 0.0
        %972 = vmatpush1.msra.mxu0 %v969
        %973 = vmatprep.subr.mxu0 0.0
        %974 = vmatpush1.msra.mxu0 %v970
        %975 = vmatprep.subr.mxu0 0.0
        %976 = vmatpush1.msra.mxu0 0.0
        %977 = vmatprep.subr.mxu0 0.0
        %978 = vmatpush1.msra.mxu0 0.0
        %979 = vmatprep.subr.mxu0 0.0
        %980 = vmatpush1.msra.mxu0 0.0
        %981 = vmatprep.subr.mxu0 0.0
        %982 = vmatpush1.msra.mxu0 0.0
        %983 = vmatprep.subr.mxu0 0.0
        %984 = vmatpush1.msra.mxu0 0.0
        %985 = vmatprep.subr.mxu0 0.0
        %986 = vmatpush1.msra.mxu0 0.0
        %987 = vmatprep.subr.mxu0 0.0
        %988 = vmatpush1.msra.mxu0 0.0
        %989 = vmatprep.subr.mxu0 0.0
        %990 = vmatpush1.msra.mxu0 0.0
        %991 = vmatprep.subr.mxu0 0.0
        %992 = vmatpush1.msra.mxu0 0.0
        %993 = vmatprep.subr.mxu0 0.0
        %994 = vmatpush1.msra.mxu0 0.0
        %995 = vmatprep.subr.mxu0 0.0
        %996 = vmatpush1.msra.mxu0 0.0
        %997 = vmatprep.subr.mxu0 0.0
        %998 = vmatpush1.msra.mxu0 0.0
        %999 = vmatprep.subr.mxu0 0.0
        %1000 = vmatpush1.msra.mxu0 0.0
        %1001 = vmatprep.subr.mxu0 0.0
        %1002 = vmatpush1.msra.mxu0 0.0
        %1003 = vmatprep.subr.mxu0 0.0
        %1004 = vmatpush1.msra.mxu0 0.0
        %1005 = vmatprep.subr.mxu0 0.0
        %1006 = vmatpush1.msra.mxu0 0.0
        %1007 = vmatprep.subr.mxu0 0.0
        %1008 = vmatpush1.msra.mxu0 0.0
        %1009 = vmatprep.subr.mxu0 0.0
        %1010 = vmatpush1.msra.mxu0 0.0
        %1011 = vmatprep.subr.mxu0 0.0
        %1012 = vmatpush1.msra.mxu0 0.0
        %1013 = vmatprep.subr.mxu0 0.0
        %1014 = vmatpush1.msra.mxu0 0.0
        %1015 = vmatprep.subr.mxu0 0.0
        %1016 = vmatpush1.msra.mxu0 0.0
        %1017 = vmatprep.subr.mxu0 0.0
        %1018 = vmatpush1.msra.mxu0 0.0
        %1019 = vmatprep.subr.mxu0 0.0
        %1020 = vmatpush1.msra.mxu0 0.0
        %1021 = vmatprep.subr.mxu0 0.0
        %1022 = vmatpush1.msra.mxu0 0.0
        %1023 = vmatprep.subr.mxu0 0.0
        %1024 = vmatpush1.msra.mxu0 0.0
        %1025 = vmatprep.subr.mxu0 0.0
        %1026 = vmatpush1.msra.mxu0 0.0
        %1027 = vmatprep.subr.mxu0 0.0
        %1028 = vmatpush1.msra.mxu0 0.0
        %1029 = vmatprep.subr.mxu0 0.0
        %1030 = vmatpush1.msra.mxu0 0.0
        %1031 = vmatprep.subr.mxu0 0.0
        %1032 = vmatpush1.msra.mxu0 0.0
        %1033 = vmatprep.subr.mxu0 0.0
        %1034 = vmatpush1.msra.mxu0 0.0
        %1035 = vmatprep.mubr.f32.mxu0 0.0
        %1036 = vmatmul.mubr.f32.gmra.mrb[0].mxu0 %v288
        %v1037 = vpop.f32.mrb[0].mxu0
        %v1038 = vadd.f32 0.0, %v1037
        %v1039 = vpop.f32.mrb[0].mxu0
        %1040 = vmatprep.mubr.f32.mxu0 0.0
        %1041 = vmatmul.mubr.f32.gmra.mrb[0].mxu0 %v291
        %v1042 = vpop.f32.mrb[0].mxu0
        %v1043 = vadd.f32 0.0, %v1042
        %v1044 = vpop.f32.mrb[0].mxu0
        %1045 = vmatprep.mubr.f32.mxu0 0.0
        %1046 = vmatmul.mubr.f32.gmra.mrb[0].mxu0 %v294
        %v1047 = vpop.f32.mrb[0].mxu0
        %v1048 = vadd.f32 0.0, %v1047
        %v1049 = vpop.f32.mrb[0].mxu0
        %1050 = vmatprep.mubr.f32.mxu0 0.0
        %1051 = vmatmul.mubr.f32.gmra.mrb[0].mxu0 %v297
        %v1052 = vpop.f32.mrb[0].mxu0
        %v1053 = vadd.f32 0.0, %v1052
        %v1054 = vpop.f32.mrb[0].mxu0
        %1055 = vdwg.mxu0
        %1056 = vset.pattern.permute.xlu0 6
        %1057 = vperm.xlu0 %1056, %v256
        %v1058 = vpop.permute.xlu0 %1057
        %1060 = vset.pattern.permute.xlu0 6
        %1061 = vperm.xlu0 %1060, %v257
        %v1062 = vpop.permute.xlu0 %1061
        %1064 = vset.pattern.permute.xlu0 6
        %1065 = vperm.xlu0 %1064, %v258
        %v1066 = vpop.permute.xlu0 %1065
        %1068 = vset.pattern.permute.xlu0 6
        %1069 = vperm.xlu0 %1068, %v259
        %v1070 = vpop.permute.xlu0 %1069
        %v1072 = vmul.f32 %v1058, %v1038
        %v1073 = vmul.f32 %v1062, %v1043
        %v1074 = vmul.f32 %v1066, %v1048
        %v1075 = vmul.f32 %v1070, %v1053
        %v1076 = vadd.f32 %v964, %v1072
        %v1077 = vadd.f32 %v965, %v1073
        %v1078 = vadd.f32 %v966, %v1074
        %v1079 = vadd.f32 %v967, %v1075
        %s1080 = scalar_lea.vmem [#allocation2], 112
        %v1081 = vld [vmem:[%s1080] sm:$0xff]
        %v1082 = vld [vmem:[%s1080 + $0x8] sm:$0xff]
        %1083 = vmatprep.subr.mxu0 0.0
        %1084 = vmatpush1.msra.mxu0 %v1081
        %1085 = vmatprep.subr.mxu0 0.0
        %1086 = vmatpush1.msra.mxu0 %v1082
        %1087 = vmatprep.subr.mxu0 0.0
        %1088 = vmatpush1.msra.mxu0 0.0
        %1089 = vmatprep.subr.mxu0 0.0
        %1090 = vmatpush1.msra.mxu0 0.0
        %1091 = vmatprep.subr.mxu0 0.0
        %1092 = vmatpush1.msra.mxu0 0.0
        %1093 = vmatprep.subr.mxu0 0.0
        %1094 = vmatpush1.msra.mxu0 0.0
        %1095 = vmatprep.subr.mxu0 0.0
        %1096 = vmatpush1.msra.mxu0 0.0
        %1097 = vmatprep.subr.mxu0 0.0
        %1098 = vmatpush1.msra.mxu0 0.0
        %1099 = vmatprep.subr.mxu0 0.0
        %1100 = vmatpush1.msra.mxu0 0.0
        %1101 = vmatprep.subr.mxu0 0.0
        %1102 = vmatpush1.msra.mxu0 0.0
        %1103 = vmatprep.subr.mxu0 0.0
        %1104 = vmatpush1.msra.mxu0 0.0
        %1105 = vmatprep.subr.mxu0 0.0
        %1106 = vmatpush1.msra.mxu0 0.0
        %1107 = vmatprep.subr.mxu0 0.0
        %1108 = vmatpush1.msra.mxu0 0.0
        %1109 = vmatprep.subr.mxu0 0.0
        %1110 = vmatpush1.msra.mxu0 0.0
        %1111 = vmatprep.subr.mxu0 0.0
        %1112 = vmatpush1.msra.mxu0 0.0
        %1113 = vmatprep.subr.mxu0 0.0
        %1114 = vmatpush1.msra.mxu0 0.0
        %1115 = vmatprep.subr.mxu0 0.0
        %1116 = vmatpush1.msra.mxu0 0.0
        %1117 = vmatprep.subr.mxu0 0.0
        %1118 = vmatpush1.msra.mxu0 0.0
        %1119 = vmatprep.subr.mxu0 0.0
        %1120 = vmatpush1.msra.mxu0 0.0
        %1121 = vmatprep.subr.mxu0 0.0
        %1122 = vmatpush1.msra.mxu0 0.0
        %1123 = vmatprep.subr.mxu0 0.0
        %1124 = vmatpush1.msra.mxu0 0.0
        %1125 = vmatprep.subr.mxu0 0.0
        %1126 = vmatpush1.msra.mxu0 0.0
        %1127 = vmatprep.subr.mxu0 0.0
        %1128 = vmatpush1.msra.mxu0 0.0
        %1129 = vmatprep.subr.mxu0 0.0
        %1130 = vmatpush1.msra.mxu0 0.0
        %1131 = vmatprep.subr.mxu0 0.0
        %1132 = vmatpush1.msra.mxu0 0.0
        %1133 = vmatprep.subr.mxu0 0.0
        %1134 = vmatpush1.msra.mxu0 0.0
        %1135 = vmatprep.subr.mxu0 0.0
        %1136 = vmatpush1.msra.mxu0 0.0
        %1137 = vmatprep.subr.mxu0 0.0
        %1138 = vmatpush1.msra.mxu0 0.0
        %1139 = vmatprep.subr.mxu0 0.0
        %1140 = vmatpush1.msra.mxu0 0.0
        %1141 = vmatprep.subr.mxu0 0.0
        %1142 = vmatpush1.msra.mxu0 0.0
        %1143 = vmatprep.subr.mxu0 0.0
        %1144 = vmatpush1.msra.mxu0 0.0
        %1145 = vmatprep.subr.mxu0 0.0
        %1146 = vmatpush1.msra.mxu0 0.0
        %1147 = vmatprep.mubr.f32.mxu0 0.0
        %1148 = vmatmul.mubr.f32.gmra.mrb[0].mxu0 %v288
        %v1149 = vpop.f32.mrb[0].mxu0
        %v1150 = vadd.f32 0.0, %v1149
        %v1151 = vpop.f32.mrb[0].mxu0
        %1152 = vmatprep.mubr.f32.mxu0 0.0
        %1153 = vmatmul.mubr.f32.gmra.mrb[0].mxu0 %v291
        %v1154 = vpop.f32.mrb[0].mxu0
        %v1155 = vadd.f32 0.0, %v1154
        %v1156 = vpop.f32.mrb[0].mxu0
        %1157 = vmatprep.mubr.f32.mxu0 0.0
        %1158 = vmatmul.mubr.f32.gmra.mrb[0].mxu0 %v294
        %v1159 = vpop.f32.mrb[0].mxu0
        %v1160 = vadd.f32 0.0, %v1159
        %v1161 = vpop.f32.mrb[0].mxu0
        %1162 = vmatprep.mubr.f32.mxu0 0.0
        %1163 = vmatmul.mubr.f32.gmra.mrb[0].mxu0 %v297
        %v1164 = vpop.f32.mrb[0].mxu0
        %v1165 = vadd.f32 0.0, %v1164
        %v1166 = vpop.f32.mrb[0].mxu0
        %1167 = vdwg.mxu0
        %1168 = vset.pattern.permute.xlu0 7
        %1169 = vperm.xlu0 %1168, %v256
        %v1170 = vpop.permute.xlu0 %1169
        %1172 = vset.pattern.permute.xlu0 7
        %1173 = vperm.xlu0 %1172, %v257
        %v1174 = vpop.permute.xlu0 %1173
        %1176 = vset.pattern.permute.xlu0 7
        %1177 = vperm.xlu0 %1176, %v258
        %v1178 = vpop.permute.xlu0 %1177
        %1180 = vset.pattern.permute.xlu0 7
        %1181 = vperm.xlu0 %1180, %v259
        %v1182 = vpop.permute.xlu0 %1181
        %v1184 = vmul.f32 %v1170, %v1150
        %v1185 = vmul.f32 %v1174, %v1155
        %v1186 = vmul.f32 %v1178, %v1160
        %v1187 = vmul.f32 %v1182, %v1165
        %v1188 = vadd.f32 %v1076, %v1184
        %v1189 = vadd.f32 %v1077, %v1185
        %v1190 = vadd.f32 %v1078, %v1186
        %v1191 = vadd.f32 %v1079, %v1187
        %s1192 = scalar_lea.vmem [#allocation2], 128
        %v1193 = vld [vmem:[%s1192] sm:$0xff]
        %v1194 = vld [vmem:[%s1192 + $0x8] sm:$0xff]
        %1195 = vmatprep.subr.mxu0 0.0
        %1196 = vmatpush1.msra.mxu0 %v1193
        %1197 = vmatprep.subr.mxu0 0.0
        %1198 = vmatpush1.msra.mxu0 %v1194
        %1199 = vmatprep.subr.mxu0 0.0
        %1200 = vmatpush1.msra.mxu0 0.0
        %1201 = vmatprep.subr.mxu0 0.0
        %1202 = vmatpush1.msra.mxu0 0.0
        %1203 = vmatprep.subr.mxu0 0.0
        %1204 = vmatpush1.msra.mxu0 0.0
        %1205 = vmatprep.subr.mxu0 0.0
        %1206 = vmatpush1.msra.mxu0 0.0
        %1207 = vmatprep.subr.mxu0 0.0
        %1208 = vmatpush1.msra.mxu0 0.0
        %1209 = vmatprep.subr.mxu0 0.0
        %1210 = vmatpush1.msra.mxu0 0.0
        %1211 = vmatprep.subr.mxu0 0.0
        %1212 = vmatpush1.msra.mxu0 0.0
        %1213 = vmatprep.subr.mxu0 0.0
        %1214 = vmatpush1.msra.mxu0 0.0
        %1215 = vmatprep.subr.mxu0 0.0
        %1216 = vmatpush1.msra.mxu0 0.0
        %1217 = vmatprep.subr.mxu0 0.0
        %1218 = vmatpush1.msra.mxu0 0.0
        %1219 = vmatprep.subr.mxu0 0.0
        %1220 = vmatpush1.msra.mxu0 0.0
        %1221 = vmatprep.subr.mxu0 0.0
        %1222 = vmatpush1.msra.mxu0 0.0
        %1223 = vmatprep.subr.mxu0 0.0
        %1224 = vmatpush1.msra.mxu0 0.0
        %1225 = vmatprep.subr.mxu0 0.0
        %1226 = vmatpush1.msra.mxu0 0.0
        %1227 = vmatprep.subr.mxu0 0.0
        %1228 = vmatpush1.msra.mxu0 0.0
        %1229 = vmatprep.subr.mxu0 0.0
        %1230 = vmatpush1.msra.mxu0 0.0
        %1231 = vmatprep.subr.mxu0 0.0
        %1232 = vmatpush1.msra.mxu0 0.0
        %1233 = vmatprep.subr.mxu0 0.0
        %1234 = vmatpush1.msra.mxu0 0.0
        %1235 = vmatprep.subr.mxu0 0.0
        %1236 = vmatpush1.msra.mxu0 0.0
        %1237 = vmatprep.subr.mxu0 0.0
        %1238 = vmatpush1.msra.mxu0 0.0
        %1239 = vmatprep.subr.mxu0 0.0
        %1240 = vmatpush1.msra.mxu0 0.0
        %1241 = vmatprep.subr.mxu0 0.0
        %1242 = vmatpush1.msra.mxu0 0.0
        %1243 = vmatprep.subr.mxu0 0.0
        %1244 = vmatpush1.msra.mxu0 0.0
        %1245 = vmatprep.subr.mxu0 0.0
        %1246 = vmatpush1.msra.mxu0 0.0
        %1247 = vmatprep.subr.mxu0 0.0
        %1248 = vmatpush1.msra.mxu0 0.0
        %1249 = vmatprep.subr.mxu0 0.0
        %1250 = vmatpush1.msra.mxu0 0.0
        %1251 = vmatprep.subr.mxu0 0.0
        %1252 = vmatpush1.msra.mxu0 0.0
        %1253 = vmatprep.subr.mxu0 0.0
        %1254 = vmatpush1.msra.mxu0 0.0
        %1255 = vmatprep.subr.mxu0 0.0
        %1256 = vmatpush1.msra.mxu0 0.0
        %1257 = vmatprep.subr.mxu0 0.0
        %1258 = vmatpush1.msra.mxu0 0.0
        %1259 = vmatprep.mubr.f32.mxu0 0.0
        %1260 = vmatmul.mubr.f32.gmra.mrb[0].mxu0 %v288
        %v1261 = vpop.f32.mrb[0].mxu0
        %v1262 = vadd.f32 0.0, %v1261
        %v1263 = vpop.f32.mrb[0].mxu0
        %1264 = vmatprep.mubr.f32.mxu0 0.0
        %1265 = vmatmul.mubr.f32.gmra.mrb[0].mxu0 %v291
        %v1266 = vpop.f32.mrb[0].mxu0
        %v1267 = vadd.f32 0.0, %v1266
        %v1268 = vpop.f32.mrb[0].mxu0
        %1269 = vmatprep.mubr.f32.mxu0 0.0
        %1270 = vmatmul.mubr.f32.gmra.mrb[0].mxu0 %v294
        %v1271 = vpop.f32.mrb[0].mxu0
        %v1272 = vadd.f32 0.0, %v1271
        %v1273 = vpop.f32.mrb[0].mxu0
        %1274 = vmatprep.mubr.f32.mxu0 0.0
        %1275 = vmatmul.mubr.f32.gmra.mrb[0].mxu0 %v297
        %v1276 = vpop.f32.mrb[0].mxu0
        %v1277 = vadd.f32 0.0, %v1276
        %v1278 = vpop.f32.mrb[0].mxu0
        %1279 = vdwg.mxu0
        %1280 = vset.pattern.permute.xlu0 8
        %1281 = vperm.xlu0 %1280, %v256
        %v1282 = vpop.permute.xlu0 %1281
        %1284 = vset.pattern.permute.xlu0 8
        %1285 = vperm.xlu0 %1284, %v257
        %v1286 = vpop.permute.xlu0 %1285
        %1288 = vset.pattern.permute.xlu0 8
        %1289 = vperm.xlu0 %1288, %v258
        %v1290 = vpop.permute.xlu0 %1289
        %1292 = vset.pattern.permute.xlu0 8
        %1293 = vperm.xlu0 %1292, %v259
        %v1294 = vpop.permute.xlu0 %1293
        %v1296 = vmul.f32 %v1282, %v1262
        %v1297 = vmul.f32 %v1286, %v1267
        %v1298 = vmul.f32 %v1290, %v1272
        %v1299 = vmul.f32 %v1294, %v1277
        %v1300 = vadd.f32 %v1188, %v1296
        %v1301 = vadd.f32 %v1189, %v1297
        %v1302 = vadd.f32 %v1190, %v1298
        %v1303 = vadd.f32 %v1191, %v1299
        %s1304 = scalar_lea.vmem [#allocation2], 144
        %v1305 = vld [vmem:[%s1304] sm:$0xff]
        %v1306 = vld [vmem:[%s1304 + $0x8] sm:$0xff]
        %1307 = vmatprep.subr.mxu0 0.0
        %1308 = vmatpush1.msra.mxu0 %v1305
        %1309 = vmatprep.subr.mxu0 0.0
        %1310 = vmatpush1.msra.mxu0 %v1306
        %1311 = vmatprep.subr.mxu0 0.0
        %1312 = vmatpush1.msra.mxu0 0.0
        %1313 = vmatprep.subr.mxu0 0.0
        %1314 = vmatpush1.msra.mxu0 0.0
        %1315 = vmatprep.subr.mxu0 0.0
        %1316 = vmatpush1.msra.mxu0 0.0
        %1317 = vmatprep.subr.mxu0 0.0
        %1318 = vmatpush1.msra.mxu0 0.0
        %1319 = vmatprep.subr.mxu0 0.0
        %1320 = vmatpush1.msra.mxu0 0.0
        %1321 = vmatprep.subr.mxu0 0.0
        %1322 = vmatpush1.msra.mxu0 0.0
        %1323 = vmatprep.subr.mxu0 0.0
        %1324 = vmatpush1.msra.mxu0 0.0
        %1325 = vmatprep.subr.mxu0 0.0
        %1326 = vmatpush1.msra.mxu0 0.0
        %1327 = vmatprep.subr.mxu0 0.0
        %1328 = vmatpush1.msra.mxu0 0.0
        %1329 = vmatprep.subr.mxu0 0.0
        %1330 = vmatpush1.msra.mxu0 0.0
        %1331 = vmatprep.subr.mxu0 0.0
        %1332 = vmatpush1.msra.mxu0 0.0
        %1333 = vmatprep.subr.mxu0 0.0
        %1334 = vmatpush1.msra.mxu0 0.0
        %1335 = vmatprep.subr.mxu0 0.0
        %1336 = vmatpush1.msra.mxu0 0.0
        %1337 = vmatprep.subr.mxu0 0.0
        %1338 = vmatpush1.msra.mxu0 0.0
        %1339 = vmatprep.subr.mxu0 0.0
        %1340 = vmatpush1.msra.mxu0 0.0
        %1341 = vmatprep.subr.mxu0 0.0
        %1342 = vmatpush1.msra.mxu0 0.0
        %1343 = vmatprep.subr.mxu0 0.0
        %1344 = vmatpush1.msra.mxu0 0.0
        %1345 = vmatprep.subr.mxu0 0.0
        %1346 = vmatpush1.msra.mxu0 0.0
        %1347 = vmatprep.subr.mxu0 0.0
        %1348 = vmatpush1.msra.mxu0 0.0
        %1349 = vmatprep.subr.mxu0 0.0
        %1350 = vmatpush1.msra.mxu0 0.0
        %1351 = vmatprep.subr.mxu0 0.0
        %1352 = vmatpush1.msra.mxu0 0.0
        %1353 = vmatprep.subr.mxu0 0.0
        %1354 = vmatpush1.msra.mxu0 0.0
        %1355 = vmatprep.subr.mxu0 0.0
        %1356 = vmatpush1.msra.mxu0 0.0
        %1357 = vmatprep.subr.mxu0 0.0
        %1358 = vmatpush1.msra.mxu0 0.0
        %1359 = vmatprep.subr.mxu0 0.0
        %1360 = vmatpush1.msra.mxu0 0.0
        %1361 = vmatprep.subr.mxu0 0.0
        %1362 = vmatpush1.msra.mxu0 0.0
        %1363 = vmatprep.subr.mxu0 0.0
        %1364 = vmatpush1.msra.mxu0 0.0
        %1365 = vmatprep.subr.mxu0 0.0
        %1366 = vmatpush1.msra.mxu0 0.0
        %1367 = vmatprep.subr.mxu0 0.0
        %1368 = vmatpush1.msra.mxu0 0.0
        %1369 = vmatprep.subr.mxu0 0.0
        %1370 = vmatpush1.msra.mxu0 0.0
        %1371 = vmatprep.mubr.f32.mxu0 0.0
        %1372 = vmatmul.mubr.f32.gmra.mrb[0].mxu0 %v288
        %v1373 = vpop.f32.mrb[0].mxu0
        %v1374 = vadd.f32 0.0, %v1373
        %v1375 = vpop.f32.mrb[0].mxu0
        %1376 = vmatprep.mubr.f32.mxu0 0.0
        %1377 = vmatmul.mubr.f32.gmra.mrb[0].mxu0 %v291
        %v1378 = vpop.f32.mrb[0].mxu0
        %v1379 = vadd.f32 0.0, %v1378
        %v1380 = vpop.f32.mrb[0].mxu0
        %1381 = vmatprep.mubr.f32.mxu0 0.0
        %1382 = vmatmul.mubr.f32.gmra.mrb[0].mxu0 %v294
        %v1383 = vpop.f32.mrb[0].mxu0
        %v1384 = vadd.f32 0.0, %v1383
        %v1385 = vpop.f32.mrb[0].mxu0
        %1386 = vmatprep.mubr.f32.mxu0 0.0
        %1387 = vmatmul.mubr.f32.gmra.mrb[0].mxu0 %v297
        %v1388 = vpop.f32.mrb[0].mxu0
        %v1389 = vadd.f32 0.0, %v1388
        %v1390 = vpop.f32.mrb[0].mxu0
        %1391 = vdwg.mxu0
        %1392 = vset.pattern.permute.xlu0 9
        %1393 = vperm.xlu0 %1392, %v256
        %v1394 = vpop.permute.xlu0 %1393
        %1396 = vset.pattern.permute.xlu0 9
        %1397 = vperm.xlu0 %1396, %v257
        %v1398 = vpop.permute.xlu0 %1397
        %1400 = vset.pattern.permute.xlu0 9
        %1401 = vperm.xlu0 %1400, %v258
        %v1402 = vpop.permute.xlu0 %1401
        %1404 = vset.pattern.permute.xlu0 9
        %1405 = vperm.xlu0 %1404, %v259
        %v1406 = vpop.permute.xlu0 %1405
        %v1408 = vmul.f32 %v1394, %v1374
        %v1409 = vmul.f32 %v1398, %v1379
        %v1410 = vmul.f32 %v1402, %v1384
        %v1411 = vmul.f32 %v1406, %v1389
        %v1412 = vadd.f32 %v1300, %v1408
        %v1413 = vadd.f32 %v1301, %v1409
        %v1414 = vadd.f32 %v1302, %v1410
        %v1415 = vadd.f32 %v1303, %v1411
        %s1416 = scalar_lea.vmem [#allocation2], 160
        %v1417 = vld [vmem:[%s1416] sm:$0xff]
        %v1418 = vld [vmem:[%s1416 + $0x8] sm:$0xff]
        %1419 = vmatprep.subr.mxu0 0.0
        %1420 = vmatpush1.msra.mxu0 %v1417
        %1421 = vmatprep.subr.mxu0 0.0
        %1422 = vmatpush1.msra.mxu0 %v1418
        %1423 = vmatprep.subr.mxu0 0.0
        %1424 = vmatpush1.msra.mxu0 0.0
        %1425 = vmatprep.subr.mxu0 0.0
        %1426 = vmatpush1.msra.mxu0 0.0
        %1427 = vmatprep.subr.mxu0 0.0
        %1428 = vmatpush1.msra.mxu0 0.0
        %1429 = vmatprep.subr.mxu0 0.0
        %1430 = vmatpush1.msra.mxu0 0.0
        %1431 = vmatprep.subr.mxu0 0.0
        %1432 = vmatpush1.msra.mxu0 0.0
        %1433 = vmatprep.subr.mxu0 0.0
        %1434 = vmatpush1.msra.mxu0 0.0
        %1435 = vmatprep.subr.mxu0 0.0
        %1436 = vmatpush1.msra.mxu0 0.0
        %1437 = vmatprep.subr.mxu0 0.0
        %1438 = vmatpush1.msra.mxu0 0.0
        %1439 = vmatprep.subr.mxu0 0.0
        %1440 = vmatpush1.msra.mxu0 0.0
        %1441 = vmatprep.subr.mxu0 0.0
        %1442 = vmatpush1.msra.mxu0 0.0
        %1443 = vmatprep.subr.mxu0 0.0
        %1444 = vmatpush1.msra.mxu0 0.0
        %1445 = vmatprep.subr.mxu0 0.0
        %1446 = vmatpush1.msra.mxu0 0.0
        %1447 = vmatprep.subr.mxu0 0.0
        %1448 = vmatpush1.msra.mxu0 0.0
        %1449 = vmatprep.subr.mxu0 0.0
        %1450 = vmatpush1.msra.mxu0 0.0
        %1451 = vmatprep.subr.mxu0 0.0
        %1452 = vmatpush1.msra.mxu0 0.0
        %1453 = vmatprep.subr.mxu0 0.0
        %1454 = vmatpush1.msra.mxu0 0.0
        %1455 = vmatprep.subr.mxu0 0.0
        %1456 = vmatpush1.msra.mxu0 0.0
        %1457 = vmatprep.subr.mxu0 0.0
        %1458 = vmatpush1.msra.mxu0 0.0
        %1459 = vmatprep.subr.mxu0 0.0
        %1460 = vmatpush1.msra.mxu0 0.0
        %1461 = vmatprep.subr.mxu0 0.0
        %1462 = vmatpush1.msra.mxu0 0.0
        %1463 = vmatprep.subr.mxu0 0.0
        %1464 = vmatpush1.msra.mxu0 0.0
        %1465 = vmatprep.subr.mxu0 0.0
        %1466 = vmatpush1.msra.mxu0 0.0
        %1467 = vmatprep.subr.mxu0 0.0
        %1468 = vmatpush1.msra.mxu0 0.0
        %1469 = vmatprep.subr.mxu0 0.0
        %1470 = vmatpush1.msra.mxu0 0.0
        %1471 = vmatprep.subr.mxu0 0.0
        %1472 = vmatpush1.msra.mxu0 0.0
        %1473 = vmatprep.subr.mxu0 0.0
        %1474 = vmatpush1.msra.mxu0 0.0
        %1475 = vmatprep.subr.mxu0 0.0
        %1476 = vmatpush1.msra.mxu0 0.0
        %1477 = vmatprep.subr.mxu0 0.0
        %1478 = vmatpush1.msra.mxu0 0.0
        %1479 = vmatprep.subr.mxu0 0.0
        %1480 = vmatpush1.msra.mxu0 0.0
        %1481 = vmatprep.subr.mxu0 0.0
        %1482 = vmatpush1.msra.mxu0 0.0
        %1483 = vmatprep.mubr.f32.mxu0 0.0
        %1484 = vmatmul.mubr.f32.gmra.mrb[0].mxu0 %v288
        %v1485 = vpop.f32.mrb[0].mxu0
        %v1486 = vadd.f32 0.0, %v1485
        %v1487 = vpop.f32.mrb[0].mxu0
        %1488 = vmatprep.mubr.f32.mxu0 0.0
        %1489 = vmatmul.mubr.f32.gmra.mrb[0].mxu0 %v291
        %v1490 = vpop.f32.mrb[0].mxu0
        %v1491 = vadd.f32 0.0, %v1490
        %v1492 = vpop.f32.mrb[0].mxu0
        %1493 = vmatprep.mubr.f32.mxu0 0.0
        %1494 = vmatmul.mubr.f32.gmra.mrb[0].mxu0 %v294
        %v1495 = vpop.f32.mrb[0].mxu0
        %v1496 = vadd.f32 0.0, %v1495
        %v1497 = vpop.f32.mrb[0].mxu0
        %1498 = vmatprep.mubr.f32.mxu0 0.0
        %1499 = vmatmul.mubr.f32.gmra.mrb[0].mxu0 %v297
        %v1500 = vpop.f32.mrb[0].mxu0
        %v1501 = vadd.f32 0.0, %v1500
        %v1502 = vpop.f32.mrb[0].mxu0
        %1503 = vdwg.mxu0
        %1504 = vset.pattern.permute.xlu0 10
        %1505 = vperm.xlu0 %1504, %v256
        %v1506 = vpop.permute.xlu0 %1505
        %1508 = vset.pattern.permute.xlu0 10
        %1509 = vperm.xlu0 %1508, %v257
        %v1510 = vpop.permute.xlu0 %1509
        %1512 = vset.pattern.permute.xlu0 10
        %1513 = vperm.xlu0 %1512, %v258
        %v1514 = vpop.permute.xlu0 %1513
        %1516 = vset.pattern.permute.xlu0 10
        %1517 = vperm.xlu0 %1516, %v259
        %v1518 = vpop.permute.xlu0 %1517
        %v1520 = vmul.f32 %v1506, %v1486
        %v1521 = vmul.f32 %v1510, %v1491
        %v1522 = vmul.f32 %v1514, %v1496
        %v1523 = vmul.f32 %v1518, %v1501
        %v1524 = vadd.f32 %v1412, %v1520
        %v1525 = vadd.f32 %v1413, %v1521
        %v1526 = vadd.f32 %v1414, %v1522
        %v1527 = vadd.f32 %v1415, %v1523
        %s1528 = scalar_lea.vmem [#allocation2], 176
        %v1529 = vld [vmem:[%s1528] sm:$0xff]
        %v1530 = vld [vmem:[%s1528 + $0x8] sm:$0xff]
        %1531 = vmatprep.subr.mxu0 0.0
        %1532 = vmatpush1.msra.mxu0 %v1529
        %1533 = vmatprep.subr.mxu0 0.0
        %1534 = vmatpush1.msra.mxu0 %v1530
        %1535 = vmatprep.subr.mxu0 0.0
        %1536 = vmatpush1.msra.mxu0 0.0
        %1537 = vmatprep.subr.mxu0 0.0
        %1538 = vmatpush1.msra.mxu0 0.0
        %1539 = vmatprep.subr.mxu0 0.0
        %1540 = vmatpush1.msra.mxu0 0.0
        %1541 = vmatprep.subr.mxu0 0.0
        %1542 = vmatpush1.msra.mxu0 0.0
        %1543 = vmatprep.subr.mxu0 0.0
        %1544 = vmatpush1.msra.mxu0 0.0
        %1545 = vmatprep.subr.mxu0 0.0
        %1546 = vmatpush1.msra.mxu0 0.0
        %1547 = vmatprep.subr.mxu0 0.0
        %1548 = vmatpush1.msra.mxu0 0.0
        %1549 = vmatprep.subr.mxu0 0.0
        %1550 = vmatpush1.msra.mxu0 0.0
        %1551 = vmatprep.subr.mxu0 0.0
        %1552 = vmatpush1.msra.mxu0 0.0
        %1553 = vmatprep.subr.mxu0 0.0
        %1554 = vmatpush1.msra.mxu0 0.0
        %1555 = vmatprep.subr.mxu0 0.0
        %1556 = vmatpush1.msra.mxu0 0.0
        %1557 = vmatprep.subr.mxu0 0.0
        %1558 = vmatpush1.msra.mxu0 0.0
        %1559 = vmatprep.subr.mxu0 0.0
        %1560 = vmatpush1.msra.mxu0 0.0
        %1561 = vmatprep.subr.mxu0 0.0
        %1562 = vmatpush1.msra.mxu0 0.0
        %1563 = vmatprep.subr.mxu0 0.0
        %1564 = vmatpush1.msra.mxu0 0.0
        %1565 = vmatprep.subr.mxu0 0.0
        %1566 = vmatpush1.msra.mxu0 0.0
        %1567 = vmatprep.subr.mxu0 0.0
        %1568 = vmatpush1.msra.mxu0 0.0
        %1569 = vmatprep.subr.mxu0 0.0
        %1570 = vmatpush1.msra.mxu0 0.0
        %1571 = vmatprep.subr.mxu0 0.0
        %1572 = vmatpush1.msra.mxu0 0.0
        %1573 = vmatprep.subr.mxu0 0.0
        %1574 = vmatpush1.msra.mxu0 0.0
        %1575 = vmatprep.subr.mxu0 0.0
        %1576 = vmatpush1.msra.mxu0 0.0
        %1577 = vmatprep.subr.mxu0 0.0
        %1578 = vmatpush1.msra.mxu0 0.0
        %1579 = vmatprep.subr.mxu0 0.0
        %1580 = vmatpush1.msra.mxu0 0.0
        %1581 = vmatprep.subr.mxu0 0.0
        %1582 = vmatpush1.msra.mxu0 0.0
        %1583 = vmatprep.subr.mxu0 0.0
        %1584 = vmatpush1.msra.mxu0 0.0
        %1585 = vmatprep.subr.mxu0 0.0
        %1586 = vmatpush1.msra.mxu0 0.0
        %1587 = vmatprep.subr.mxu0 0.0
        %1588 = vmatpush1.msra.mxu0 0.0
        %1589 = vmatprep.subr.mxu0 0.0
        %1590 = vmatpush1.msra.mxu0 0.0
        %1591 = vmatprep.subr.mxu0 0.0
        %1592 = vmatpush1.msra.mxu0 0.0
        %1593 = vmatprep.subr.mxu0 0.0
        %1594 = vmatpush1.msra.mxu0 0.0
        %1595 = vmatprep.mubr.f32.mxu0 0.0
        %1596 = vmatmul.mubr.f32.gmra.mrb[0].mxu0 %v288
        %v1597 = vpop.f32.mrb[0].mxu0
        %v1598 = vadd.f32 0.0, %v1597
        %v1599 = vpop.f32.mrb[0].mxu0
        %1600 = vmatprep.mubr.f32.mxu0 0.0
        %1601 = vmatmul.mubr.f32.gmra.mrb[0].mxu0 %v291
        %v1602 = vpop.f32.mrb[0].mxu0
        %v1603 = vadd.f32 0.0, %v1602
        %v1604 = vpop.f32.mrb[0].mxu0
        %1605 = vmatprep.mubr.f32.mxu0 0.0
        %1606 = vmatmul.mubr.f32.gmra.mrb[0].mxu0 %v294
        %v1607 = vpop.f32.mrb[0].mxu0
        %v1608 = vadd.f32 0.0, %v1607
        %v1609 = vpop.f32.mrb[0].mxu0
        %1610 = vmatprep.mubr.f32.mxu0 0.0
        %1611 = vmatmul.mubr.f32.gmra.mrb[0].mxu0 %v297
        %v1612 = vpop.f32.mrb[0].mxu0
        %v1613 = vadd.f32 0.0, %v1612
        %v1614 = vpop.f32.mrb[0].mxu0
        %1615 = vdwg.mxu0
        %1616 = vset.pattern.permute.xlu0 11
        %1617 = vperm.xlu0 %1616, %v256
        %v1618 = vpop.permute.xlu0 %1617
        %1620 = vset.pattern.permute.xlu0 11
        %1621 = vperm.xlu0 %1620, %v257
        %v1622 = vpop.permute.xlu0 %1621
        %1624 = vset.pattern.permute.xlu0 11
        %1625 = vperm.xlu0 %1624, %v258
        %v1626 = vpop.permute.xlu0 %1625
        %1628 = vset.pattern.permute.xlu0 11
        %1629 = vperm.xlu0 %1628, %v259
        %v1630 = vpop.permute.xlu0 %1629
        %v1632 = vmul.f32 %v1618, %v1598
        %v1633 = vmul.f32 %v1622, %v1603
        %v1634 = vmul.f32 %v1626, %v1608
        %v1635 = vmul.f32 %v1630, %v1613
        %v1636 = vadd.f32 %v1524, %v1632
        %v1637 = vadd.f32 %v1525, %v1633
        %v1638 = vadd.f32 %v1526, %v1634
        %v1639 = vadd.f32 %v1527, %v1635
        %s1640 = scalar_lea.vmem [#allocation2], 192
        %v1641 = vld [vmem:[%s1640] sm:$0xff]
        %v1642 = vld [vmem:[%s1640 + $0x8] sm:$0xff]
        %1643 = vmatprep.subr.mxu0 0.0
        %1644 = vmatpush1.msra.mxu0 %v1641
        %1645 = vmatprep.subr.mxu0 0.0
        %1646 = vmatpush1.msra.mxu0 %v1642
        %1647 = vmatprep.subr.mxu0 0.0
        %1648 = vmatpush1.msra.mxu0 0.0
        %1649 = vmatprep.subr.mxu0 0.0
        %1650 = vmatpush1.msra.mxu0 0.0
        %1651 = vmatprep.subr.mxu0 0.0
        %1652 = vmatpush1.msra.mxu0 0.0
        %1653 = vmatprep.subr.mxu0 0.0
        %1654 = vmatpush1.msra.mxu0 0.0
        %1655 = vmatprep.subr.mxu0 0.0
        %1656 = vmatpush1.msra.mxu0 0.0
        %1657 = vmatprep.subr.mxu0 0.0
        %1658 = vmatpush1.msra.mxu0 0.0
        %1659 = vmatprep.subr.mxu0 0.0
        %1660 = vmatpush1.msra.mxu0 0.0
        %1661 = vmatprep.subr.mxu0 0.0
        %1662 = vmatpush1.msra.mxu0 0.0
        %1663 = vmatprep.subr.mxu0 0.0
        %1664 = vmatpush1.msra.mxu0 0.0
        %1665 = vmatprep.subr.mxu0 0.0
        %1666 = vmatpush1.msra.mxu0 0.0
        %1667 = vmatprep.subr.mxu0 0.0
        %1668 = vmatpush1.msra.mxu0 0.0
        %1669 = vmatprep.subr.mxu0 0.0
        %1670 = vmatpush1.msra.mxu0 0.0
        %1671 = vmatprep.subr.mxu0 0.0
        %1672 = vmatpush1.msra.mxu0 0.0
        %1673 = vmatprep.subr.mxu0 0.0
        %1674 = vmatpush1.msra.mxu0 0.0
        %1675 = vmatprep.subr.mxu0 0.0
        %1676 = vmatpush1.msra.mxu0 0.0
        %1677 = vmatprep.subr.mxu0 0.0
        %1678 = vmatpush1.msra.mxu0 0.0
        %1679 = vmatprep.subr.mxu0 0.0
        %1680 = vmatpush1.msra.mxu0 0.0
        %1681 = vmatprep.subr.mxu0 0.0
        %1682 = vmatpush1.msra.mxu0 0.0
        %1683 = vmatprep.subr.mxu0 0.0
        %1684 = vmatpush1.msra.mxu0 0.0
        %1685 = vmatprep.subr.mxu0 0.0
        %1686 = vmatpush1.msra.mxu0 0.0
        %1687 = vmatprep.subr.mxu0 0.0
        %1688 = vmatpush1.msra.mxu0 0.0
        %1689 = vmatprep.subr.mxu0 0.0
        %1690 = vmatpush1.msra.mxu0 0.0
        %1691 = vmatprep.subr.mxu0 0.0
        %1692 = vmatpush1.msra.mxu0 0.0
        %1693 = vmatprep.subr.mxu0 0.0
        %1694 = vmatpush1.msra.mxu0 0.0
        %1695 = vmatprep.subr.mxu0 0.0
        %1696 = vmatpush1.msra.mxu0 0.0
        %1697 = vmatprep.subr.mxu0 0.0
        %1698 = vmatpush1.msra.mxu0 0.0
        %1699 = vmatprep.subr.mxu0 0.0
        %1700 = vmatpush1.msra.mxu0 0.0
        %1701 = vmatprep.subr.mxu0 0.0
        %1702 = vmatpush1.msra.mxu0 0.0
        %1703 = vmatprep.subr.mxu0 0.0
        %1704 = vmatpush1.msra.mxu0 0.0
        %1705 = vmatprep.subr.mxu0 0.0
        %1706 = vmatpush1.msra.mxu0 0.0
        %1707 = vmatprep.mubr.f32.mxu0 0.0
        %1708 = vmatmul.mubr.f32.gmra.mrb[0].mxu0 %v288
        %v1709 = vpop.f32.mrb[0].mxu0
        %v1710 = vadd.f32 0.0, %v1709
        %v1711 = vpop.f32.mrb[0].mxu0
        %1712 = vmatprep.mubr.f32.mxu0 0.0
        %1713 = vmatmul.mubr.f32.gmra.mrb[0].mxu0 %v291
        %v1714 = vpop.f32.mrb[0].mxu0
        %v1715 = vadd.f32 0.0, %v1714
        %v1716 = vpop.f32.mrb[0].mxu0
        %1717 = vmatprep.mubr.f32.mxu0 0.0
        %1718 = vmatmul.mubr.f32.gmra.mrb[0].mxu0 %v294
        %v1719 = vpop.f32.mrb[0].mxu0
        %v1720 = vadd.f32 0.0, %v1719
        %v1721 = vpop.f32.mrb[0].mxu0
        %1722 = vmatprep.mubr.f32.mxu0 0.0
        %1723 = vmatmul.mubr.f32.gmra.mrb[0].mxu0 %v297
        %v1724 = vpop.f32.mrb[0].mxu0
        %v1725 = vadd.f32 0.0, %v1724
        %v1726 = vpop.f32.mrb[0].mxu0
        %1727 = vdwg.mxu0
        %1728 = vset.pattern.permute.xlu0 12
        %1729 = vperm.xlu0 %1728, %v256
        %v1730 = vpop.permute.xlu0 %1729
        %1732 = vset.pattern.permute.xlu0 12
        %1733 = vperm.xlu0 %1732, %v257
        %v1734 = vpop.permute.xlu0 %1733
        %1736 = vset.pattern.permute.xlu0 12
        %1737 = vperm.xlu0 %1736, %v258
        %v1738 = vpop.permute.xlu0 %1737
        %1740 = vset.pattern.permute.xlu0 12
        %1741 = vperm.xlu0 %1740, %v259
        %v1742 = vpop.permute.xlu0 %1741
        %v1744 = vmul.f32 %v1730, %v1710
        %v1745 = vmul.f32 %v1734, %v1715
        %v1746 = vmul.f32 %v1738, %v1720
        %v1747 = vmul.f32 %v1742, %v1725
        %v1748 = vadd.f32 %v1636, %v1744
        %v1749 = vadd.f32 %v1637, %v1745
        %v1750 = vadd.f32 %v1638, %v1746
        %v1751 = vadd.f32 %v1639, %v1747
        %s1752 = scalar_lea.vmem [#allocation2], 208
        %v1753 = vld [vmem:[%s1752] sm:$0xff]
        %v1754 = vld [vmem:[%s1752 + $0x8] sm:$0xff]
        %1755 = vmatprep.subr.mxu0 0.0
        %1756 = vmatpush1.msra.mxu0 %v1753
        %1757 = vmatprep.subr.mxu0 0.0
        %1758 = vmatpush1.msra.mxu0 %v1754
        %1759 = vmatprep.subr.mxu0 0.0
        %1760 = vmatpush1.msra.mxu0 0.0
        %1761 = vmatprep.subr.mxu0 0.0
        %1762 = vmatpush1.msra.mxu0 0.0
        %1763 = vmatprep.subr.mxu0 0.0
        %1764 = vmatpush1.msra.mxu0 0.0
        %1765 = vmatprep.subr.mxu0 0.0
        %1766 = vmatpush1.msra.mxu0 0.0
        %1767 = vmatprep.subr.mxu0 0.0
        %1768 = vmatpush1.msra.mxu0 0.0
        %1769 = vmatprep.subr.mxu0 0.0
        %1770 = vmatpush1.msra.mxu0 0.0
        %1771 = vmatprep.subr.mxu0 0.0
        %1772 = vmatpush1.msra.mxu0 0.0
        %1773 = vmatprep.subr.mxu0 0.0
        %1774 = vmatpush1.msra.mxu0 0.0
        %1775 = vmatprep.subr.mxu0 0.0
        %1776 = vmatpush1.msra.mxu0 0.0
        %1777 = vmatprep.subr.mxu0 0.0
        %1778 = vmatpush1.msra.mxu0 0.0
        %1779 = vmatprep.subr.mxu0 0.0
        %1780 = vmatpush1.msra.mxu0 0.0
        %1781 = vmatprep.subr.mxu0 0.0
        %1782 = vmatpush1.msra.mxu0 0.0
        %1783 = vmatprep.subr.mxu0 0.0
        %1784 = vmatpush1.msra.mxu0 0.0
        %1785 = vmatprep.subr.mxu0 0.0
        %1786 = vmatpush1.msra.mxu0 0.0
        %1787 = vmatprep.subr.mxu0 0.0
        %1788 = vmatpush1.msra.mxu0 0.0
        %1789 = vmatprep.subr.mxu0 0.0
        %1790 = vmatpush1.msra.mxu0 0.0
        %1791 = vmatprep.subr.mxu0 0.0
        %1792 = vmatpush1.msra.mxu0 0.0
        %1793 = vmatprep.subr.mxu0 0.0
        %1794 = vmatpush1.msra.mxu0 0.0
        %1795 = vmatprep.subr.mxu0 0.0
        %1796 = vmatpush1.msra.mxu0 0.0
        %1797 = vmatprep.subr.mxu0 0.0
        %1798 = vmatpush1.msra.mxu0 0.0
        %1799 = vmatprep.subr.mxu0 0.0
        %1800 = vmatpush1.msra.mxu0 0.0
        %1801 = vmatprep.subr.mxu0 0.0
        %1802 = vmatpush1.msra.mxu0 0.0
        %1803 = vmatprep.subr.mxu0 0.0
        %1804 = vmatpush1.msra.mxu0 0.0
        %1805 = vmatprep.subr.mxu0 0.0
        %1806 = vmatpush1.msra.mxu0 0.0
        %1807 = vmatprep.subr.mxu0 0.0
        %1808 = vmatpush1.msra.mxu0 0.0
        %1809 = vmatprep.subr.mxu0 0.0
        %1810 = vmatpush1.msra.mxu0 0.0
        %1811 = vmatprep.subr.mxu0 0.0
        %1812 = vmatpush1.msra.mxu0 0.0
        %1813 = vmatprep.subr.mxu0 0.0
        %1814 = vmatpush1.msra.mxu0 0.0
        %1815 = vmatprep.subr.mxu0 0.0
        %1816 = vmatpush1.msra.mxu0 0.0
        %1817 = vmatprep.subr.mxu0 0.0
        %1818 = vmatpush1.msra.mxu0 0.0
        %1819 = vmatprep.mubr.f32.mxu0 0.0
        %1820 = vmatmul.mubr.f32.gmra.mrb[0].mxu0 %v288
        %v1821 = vpop.f32.mrb[0].mxu0
        %v1822 = vadd.f32 0.0, %v1821
        %v1823 = vpop.f32.mrb[0].mxu0
        %1824 = vmatprep.mubr.f32.mxu0 0.0
        %1825 = vmatmul.mubr.f32.gmra.mrb[0].mxu0 %v291
        %v1826 = vpop.f32.mrb[0].mxu0
        %v1827 = vadd.f32 0.0, %v1826
        %v1828 = vpop.f32.mrb[0].mxu0
        %1829 = vmatprep.mubr.f32.mxu0 0.0
        %1830 = vmatmul.mubr.f32.gmra.mrb[0].mxu0 %v294
        %v1831 = vpop.f32.mrb[0].mxu0
        %v1832 = vadd.f32 0.0, %v1831
        %v1833 = vpop.f32.mrb[0].mxu0
        %1834 = vmatprep.mubr.f32.mxu0 0.0
        %1835 = vmatmul.mubr.f32.gmra.mrb[0].mxu0 %v297
        %v1836 = vpop.f32.mrb[0].mxu0
        %v1837 = vadd.f32 0.0, %v1836
        %v1838 = vpop.f32.mrb[0].mxu0
        %1839 = vdwg.mxu0
        %1840 = vset.pattern.permute.xlu0 13
        %1841 = vperm.xlu0 %1840, %v256
        %v1842 = vpop.permute.xlu0 %1841
        %1844 = vset.pattern.permute.xlu0 13
        %1845 = vperm.xlu0 %1844, %v257
        %v1846 = vpop.permute.xlu0 %1845
        %1848 = vset.pattern.permute.xlu0 13
        %1849 = vperm.xlu0 %1848, %v258
        %v1850 = vpop.permute.xlu0 %1849
        %1852 = vset.pattern.permute.xlu0 13
        %1853 = vperm.xlu0 %1852, %v259
        %v1854 = vpop.permute.xlu0 %1853
        %v1856 = vmul.f32 %v1842, %v1822
        %v1857 = vmul.f32 %v1846, %v1827
        %v1858 = vmul.f32 %v1850, %v1832
        %v1859 = vmul.f32 %v1854, %v1837
        %v1860 = vadd.f32 %v1748, %v1856
        %v1861 = vadd.f32 %v1749, %v1857
        %v1862 = vadd.f32 %v1750, %v1858
        %v1863 = vadd.f32 %v1751, %v1859
        %s1864 = scalar_lea.vmem [#allocation2], 224
        %v1865 = vld [vmem:[%s1864] sm:$0xff]
        %v1866 = vld [vmem:[%s1864 + $0x8] sm:$0xff]
        %1867 = vmatprep.subr.mxu0 0.0
        %1868 = vmatpush1.msra.mxu0 %v1865
        %1869 = vmatprep.subr.mxu0 0.0
        %1870 = vmatpush1.msra.mxu0 %v1866
        %1871 = vmatprep.subr.mxu0 0.0
        %1872 = vmatpush1.msra.mxu0 0.0
        %1873 = vmatprep.subr.mxu0 0.0
        %1874 = vmatpush1.msra.mxu0 0.0
        %1875 = vmatprep.subr.mxu0 0.0
        %1876 = vmatpush1.msra.mxu0 0.0
        %1877 = vmatprep.subr.mxu0 0.0
        %1878 = vmatpush1.msra.mxu0 0.0
        %1879 = vmatprep.subr.mxu0 0.0
        %1880 = vmatpush1.msra.mxu0 0.0
        %1881 = vmatprep.subr.mxu0 0.0
        %1882 = vmatpush1.msra.mxu0 0.0
        %1883 = vmatprep.subr.mxu0 0.0
        %1884 = vmatpush1.msra.mxu0 0.0
        %1885 = vmatprep.subr.mxu0 0.0
        %1886 = vmatpush1.msra.mxu0 0.0
        %1887 = vmatprep.subr.mxu0 0.0
        %1888 = vmatpush1.msra.mxu0 0.0
        %1889 = vmatprep.subr.mxu0 0.0
        %1890 = vmatpush1.msra.mxu0 0.0
        %1891 = vmatprep.subr.mxu0 0.0
        %1892 = vmatpush1.msra.mxu0 0.0
        %1893 = vmatprep.subr.mxu0 0.0
        %1894 = vmatpush1.msra.mxu0 0.0
        %1895 = vmatprep.subr.mxu0 0.0
        %1896 = vmatpush1.msra.mxu0 0.0
        %1897 = vmatprep.subr.mxu0 0.0
        %1898 = vmatpush1.msra.mxu0 0.0
        %1899 = vmatprep.subr.mxu0 0.0
        %1900 = vmatpush1.msra.mxu0 0.0
        %1901 = vmatprep.subr.mxu0 0.0
        %1902 = vmatpush1.msra.mxu0 0.0
        %1903 = vmatprep.subr.mxu0 0.0
        %1904 = vmatpush1.msra.mxu0 0.0
        %1905 = vmatprep.subr.mxu0 0.0
        %1906 = vmatpush1.msra.mxu0 0.0
        %1907 = vmatprep.subr.mxu0 0.0
        %1908 = vmatpush1.msra.mxu0 0.0
        %1909 = vmatprep.subr.mxu0 0.0
        %1910 = vmatpush1.msra.mxu0 0.0
        %1911 = vmatprep.subr.mxu0 0.0
        %1912 = vmatpush1.msra.mxu0 0.0
        %1913 = vmatprep.subr.mxu0 0.0
        %1914 = vmatpush1.msra.mxu0 0.0
        %1915 = vmatprep.subr.mxu0 0.0
        %1916 = vmatpush1.msra.mxu0 0.0
        %1917 = vmatprep.subr.mxu0 0.0
        %1918 = vmatpush1.msra.mxu0 0.0
        %1919 = vmatprep.subr.mxu0 0.0
        %1920 = vmatpush1.msra.mxu0 0.0
        %1921 = vmatprep.subr.mxu0 0.0
        %1922 = vmatpush1.msra.mxu0 0.0
        %1923 = vmatprep.subr.mxu0 0.0
        %1924 = vmatpush1.msra.mxu0 0.0
        %1925 = vmatprep.subr.mxu0 0.0
        %1926 = vmatpush1.msra.mxu0 0.0
        %1927 = vmatprep.subr.mxu0 0.0
        %1928 = vmatpush1.msra.mxu0 0.0
        %1929 = vmatprep.subr.mxu0 0.0
        %1930 = vmatpush1.msra.mxu0 0.0
        %1931 = vmatprep.mubr.f32.mxu0 0.0
        %1932 = vmatmul.mubr.f32.gmra.mrb[0].mxu0 %v288
        %v1933 = vpop.f32.mrb[0].mxu0
        %v1934 = vadd.f32 0.0, %v1933
        %v1935 = vpop.f32.mrb[0].mxu0
        %1936 = vmatprep.mubr.f32.mxu0 0.0
        %1937 = vmatmul.mubr.f32.gmra.mrb[0].mxu0 %v291
        %v1938 = vpop.f32.mrb[0].mxu0
        %v1939 = vadd.f32 0.0, %v1938
        %v1940 = vpop.f32.mrb[0].mxu0
        %1941 = vmatprep.mubr.f32.mxu0 0.0
        %1942 = vmatmul.mubr.f32.gmra.mrb[0].mxu0 %v294
        %v1943 = vpop.f32.mrb[0].mxu0
        %v1944 = vadd.f32 0.0, %v1943
        %v1945 = vpop.f32.mrb[0].mxu0
        %1946 = vmatprep.mubr.f32.mxu0 0.0
        %1947 = vmatmul.mubr.f32.gmra.mrb[0].mxu0 %v297
        %v1948 = vpop.f32.mrb[0].mxu0
        %v1949 = vadd.f32 0.0, %v1948
        %v1950 = vpop.f32.mrb[0].mxu0
        %1951 = vdwg.mxu0
        %1952 = vset.pattern.permute.xlu0 14
        %1953 = vperm.xlu0 %1952, %v256
        %v1954 = vpop.permute.xlu0 %1953
        %1956 = vset.pattern.permute.xlu0 14
        %1957 = vperm.xlu0 %1956, %v257
        %v1958 = vpop.permute.xlu0 %1957
        %1960 = vset.pattern.permute.xlu0 14
        %1961 = vperm.xlu0 %1960, %v258
        %v1962 = vpop.permute.xlu0 %1961
        %1964 = vset.pattern.permute.xlu0 14
        %1965 = vperm.xlu0 %1964, %v259
        %v1966 = vpop.permute.xlu0 %1965
        %v1968 = vmul.f32 %v1954, %v1934
        %v1969 = vmul.f32 %v1958, %v1939
        %v1970 = vmul.f32 %v1962, %v1944
        %v1971 = vmul.f32 %v1966, %v1949
        %v1972 = vadd.f32 %v1860, %v1968
        %v1973 = vadd.f32 %v1861, %v1969
        %v1974 = vadd.f32 %v1862, %v1970
        %v1975 = vadd.f32 %v1863, %v1971
        %s1976 = scalar_lea.vmem [#allocation2], 240
        %v1977 = vld [vmem:[%s1976] sm:$0xff]
        %v1978 = vld [vmem:[%s1976 + $0x8] sm:$0xff]
        %1979 = vmatprep.subr.mxu0 0.0
        %1980 = vmatpush1.msra.mxu0 %v1977
        %1981 = vmatprep.subr.mxu0 0.0
        %1982 = vmatpush1.msra.mxu0 %v1978
        %1983 = vmatprep.subr.mxu0 0.0
        %1984 = vmatpush1.msra.mxu0 0.0
        %1985 = vmatprep.subr.mxu0 0.0
        %1986 = vmatpush1.msra.mxu0 0.0
        %1987 = vmatprep.subr.mxu0 0.0
        %1988 = vmatpush1.msra.mxu0 0.0
        %1989 = vmatprep.subr.mxu0 0.0
        %1990 = vmatpush1.msra.mxu0 0.0
        %1991 = vmatprep.subr.mxu0 0.0
        %1992 = vmatpush1.msra.mxu0 0.0
        %1993 = vmatprep.subr.mxu0 0.0
        %1994 = vmatpush1.msra.mxu0 0.0
        %1995 = vmatprep.subr.mxu0 0.0
        %1996 = vmatpush1.msra.mxu0 0.0
        %1997 = vmatprep.subr.mxu0 0.0
        %1998 = vmatpush1.msra.mxu0 0.0
        %1999 = vmatprep.subr.mxu0 0.0
        %2000 = vmatpush1.msra.mxu0 0.0
        %2001 = vmatprep.subr.mxu0 0.0
        %2002 = vmatpush1.msra.mxu0 0.0
        %2003 = vmatprep.subr.mxu0 0.0
        %2004 = vmatpush1.msra.mxu0 0.0
        %2005 = vmatprep.subr.mxu0 0.0
        %2006 = vmatpush1.msra.mxu0 0.0
        %2007 = vmatprep.subr.mxu0 0.0
        %2008 = vmatpush1.msra.mxu0 0.0
        %2009 = vmatprep.subr.mxu0 0.0
        %2010 = vmatpush1.msra.mxu0 0.0
        %2011 = vmatprep.subr.mxu0 0.0
        %2012 = vmatpush1.msra.mxu0 0.0
        %2013 = vmatprep.subr.mxu0 0.0
        %2014 = vmatpush1.msra.mxu0 0.0
        %2015 = vmatprep.subr.mxu0 0.0
        %2016 = vmatpush1.msra.mxu0 0.0
        %2017 = vmatprep.subr.mxu0 0.0
        %2018 = vmatpush1.msra.mxu0 0.0
        %2019 = vmatprep.subr.mxu0 0.0
        %2020 = vmatpush1.msra.mxu0 0.0
        %2021 = vmatprep.subr.mxu0 0.0
        %2022 = vmatpush1.msra.mxu0 0.0
        %2023 = vmatprep.subr.mxu0 0.0
        %2024 = vmatpush1.msra.mxu0 0.0
        %2025 = vmatprep.subr.mxu0 0.0
        %2026 = vmatpush1.msra.mxu0 0.0
        %2027 = vmatprep.subr.mxu0 0.0
        %2028 = vmatpush1.msra.mxu0 0.0
        %2029 = vmatprep.subr.mxu0 0.0
        %2030 = vmatpush1.msra.mxu0 0.0
        %2031 = vmatprep.subr.mxu0 0.0
        %2032 = vmatpush1.msra.mxu0 0.0
        %2033 = vmatprep.subr.mxu0 0.0
        %2034 = vmatpush1.msra.mxu0 0.0
        %2035 = vmatprep.subr.mxu0 0.0
        %2036 = vmatpush1.msra.mxu0 0.0
        %2037 = vmatprep.subr.mxu0 0.0
        %2038 = vmatpush1.msra.mxu0 0.0
        %2039 = vmatprep.subr.mxu0 0.0
        %2040 = vmatpush1.msra.mxu0 0.0
        %2041 = vmatprep.subr.mxu0 0.0
        %2042 = vmatpush1.msra.mxu0 0.0
        %2043 = vmatprep.mubr.f32.mxu0 0.0
        %2044 = vmatmul.mubr.f32.gmra.mrb[0].mxu0 %v288
        %v2045 = vpop.f32.mrb[0].mxu0
        %v2046 = vadd.f32 0.0, %v2045
        %v2047 = vpop.f32.mrb[0].mxu0
        %2048 = vmatprep.mubr.f32.mxu0 0.0
        %2049 = vmatmul.mubr.f32.gmra.mrb[0].mxu0 %v291
        %v2050 = vpop.f32.mrb[0].mxu0
        %v2051 = vadd.f32 0.0, %v2050
        %v2052 = vpop.f32.mrb[0].mxu0
        %2053 = vmatprep.mubr.f32.mxu0 0.0
        %2054 = vmatmul.mubr.f32.gmra.mrb[0].mxu0 %v294
        %v2055 = vpop.f32.mrb[0].mxu0
        %v2056 = vadd.f32 0.0, %v2055
        %v2057 = vpop.f32.mrb[0].mxu0
        %2058 = vmatprep.mubr.f32.mxu0 0.0
        %2059 = vmatmul.mubr.f32.gmra.mrb[0].mxu0 %v297
        %v2060 = vpop.f32.mrb[0].mxu0
        %v2061 = vadd.f32 0.0, %v2060
        %v2062 = vpop.f32.mrb[0].mxu0
        %2063 = vdwg.mxu0
        %2064 = vset.pattern.permute.xlu0 15
        %2065 = vperm.xlu0 %2064, %v256
        %v2066 = vpop.permute.xlu0 %2065
        %2068 = vset.pattern.permute.xlu0 15
        %2069 = vperm.xlu0 %2068, %v257
        %v2070 = vpop.permute.xlu0 %2069
        %2072 = vset.pattern.permute.xlu0 15
        %2073 = vperm.xlu0 %2072, %v258
        %v2074 = vpop.permute.xlu0 %2073
        %2076 = vset.pattern.permute.xlu0 15
        %2077 = vperm.xlu0 %2076, %v259
        %v2078 = vpop.permute.xlu0 %2077
        %v2080 = vmul.f32 %v2066, %v2046
        %v2081 = vmul.f32 %v2070, %v2051
        %v2082 = vmul.f32 %v2074, %v2056
        %v2083 = vmul.f32 %v2078, %v2061
        %v2084 = vadd.f32 %v1972, %v2080
        %v2085 = vadd.f32 %v1973, %v2081
        %v2086 = vadd.f32 %v1974, %v2082
        %v2087 = vadd.f32 %v1975, %v2083
        %v2088 = vtanh.pop %v2084
        %v2089 = vtanh.pop %v2085
        %v2090 = vtanh.pop %v2086
        %v2091 = vtanh.pop %v2087
        %2092 = vst.msk [vmem:[%s244] sm:$0xff] %vm286, %v2088
        %2093 = vst.msk [vmem:[%s244 + $0x8] sm:$0xff] %vm286, %v2089
        %2094 = vst.msk [vmem:[%s244 + $0x10] sm:$0xff] %vm286, %v2090
        %2095 = vst.msk [vmem:[%s244 + $0x18] sm:$0xff] %vm286, %v2091
        %2096 = vst.msk [vmem:[%s250] sm:$0xff] %vm286, %v2084
        %2097 = vst.msk [vmem:[%s250 + $0x8] sm:$0xff] %vm286, %v2085
        %2098 = vst.msk [vmem:[%s250 + $0x10] sm:$0xff] %vm286, %v2086
        %2099 = vst.msk [vmem:[%s250 + $0x18] sm:$0xff] %vm286, %v2087
        %s2100 = smul.u32 4, %s17
        %p2101 = scmp.lt.s32.totalorder %s2100, 7
        %s2102 = scalar_select %p2101, %s2100, 7
        %s2103 = smul.addr %s2102, 8
        %s2104 = scalar_lea.vmem %s3, %s2103
        %s2105 = smul.u32 4, %s17
        %p2106 = scmp.lt.s32.totalorder %s2105, 7
        %s2107 = scalar_select %p2106, %s2105, 7
        %s2108 = smul.addr %s2107, 8
        %s2109 = scalar_lea.vmem %s4, %s2108
        // Predicated region
        $region37: #{tpu_custom_call.1} parent=31 // pred_check
          %p2110 = pneg %p108
        $region38: #{tpu_custom_call.1} parent=31 // pred_check_branch
          %2112 = sbr.rel (%p2110) target = $region40
        $region39: #{tpu_custom_call.1} parent=31 // pred_region
          %s2113 = smul.u32 4, %s17
        $region40: #{tpu_custom_call.1} parent=31 // pred_fallthru
          _
        // Predicated region
        $region41: #{tpu_custom_call.1} parent=31 // pred_check
          %p2114 = pneg %p134
        $region42: #{tpu_custom_call.1} parent=31 // pred_check_branch
          %2116 = sbr.rel (%p2114) target = $region44
        $region43: #{tpu_custom_call.1} parent=31 // pred_region
          %s2117 = smul.u32 4, %s17
        $region44: #{tpu_custom_call.1} parent=31 // pred_fallthru
          _
      $region32: #{tpu_custom_call.1} parent=5 // pred_fallthru
        _
      %p2118 = scmp.le.s32.totalorder 2, %s12
      // Predicated region
      $region45: #{tpu_custom_call.1} parent=5 // pred_check
        %p2119 = pneg %p2118
      $region46: #{tpu_custom_call.1} parent=5 // pred_check_branch
        %2121 = sbr.rel (%p2119) target = $region48
      $region47: #{tpu_custom_call.1} parent=5 // pred_region
        %s2122 = ssub.s32 %s12, 2
        // Predicated region
        $region49: #{tpu_custom_call.1} parent=47 // pred_check
          %p2123 = pneg %p114
        $region50: #{tpu_custom_call.1} parent=47 // pred_check_branch
          %2125 = sbr.rel (%p2123) target = $region52
        $region51: #{tpu_custom_call.1} parent=47 // pred_region
          %s2126 = smul.u32 4, %s18
          %p2127 = scmp.lt.s32.totalorder %s2126, 7
          %s2128 = scalar_select %p2127, %s2126, 7
          %s2129 = smul.addr %s2128, 8
          %s2130 = scalar_lea.vmem %s3, %s2129
        $region52: #{tpu_custom_call.1} parent=47 // pred_fallthru
          _
        // Predicated region
        $region53: #{tpu_custom_call.1} parent=47 // pred_check
          %p2131 = pneg %p140
        $region54: #{tpu_custom_call.1} parent=47 // pred_check_branch
          %2133 = sbr.rel (%p2131) target = $region56
        $region55: #{tpu_custom_call.1} parent=47 // pred_region
          %s2134 = smul.u32 4, %s18
          %p2135 = scmp.lt.s32.totalorder %s2134, 7
          %s2136 = scalar_select %p2135, %s2134, 7
          %s2137 = smul.addr %s2136, 8
          %s2138 = scalar_lea.vmem %s4, %s2137
        $region56: #{tpu_custom_call.1} parent=47 // pred_fallthru
          _
      $region48: #{tpu_custom_call.1} parent=5 // pred_fallthru
        _
    $region6: #{tpu_custom_call.1} parent=1 // loop_footer
      %s16 = sadd.s32 1, %s12
    $region7: #{tpu_custom_call.1} parent=1 // loop_footer_branch
      %11 = sbr.rel target = $region3
    $region8: #{tpu_custom_call.1} parent=1 // loop_exit
      _
    %2139 = vsyncpa [#allocation3], 1
    %s2140 = scalar_lea.sflag [#allocation3], 1
    %2141 = vsyncpa %s2140, 1

</llo_original>
